<compile_context>
chip_gen: v7x
topology: tpu7x:2x2x1
jax: 0.10.0
libtpu: 0.0.40
codegen_flags: <defaults>
</compile_context>

<pallas_src>
import functools

import jax
import jax.numpy as jnp
from jax.experimental import pallas as pl
from jax.experimental.pallas import tpu as pltpu

HIDDEN = 128
INPUT = 3
IN_PAD = 8              # augmented feature dim: [x0, x1, x2, 1 (bias), 0, 0, 0, 0]
BN_EPS = 1e-5
LEAKY_SLOPE = 0.01
# bf16 = single-pass MXU operand for the serial recurrence; set jnp.float32 for strict
# parity with the f32 PyTorch reference on very long sequences.
RECURRENT_DTYPE = jnp.bfloat16


def _lstm_head_kernel(x_ref, wih_ref, whh_ref, fcw_ref, fcb_ref, out_ref,
                      xp_ref, h_ref, c_ref, *, seq_len, masked, b_valid, unroll):
    kt = pl.program_id(0)
    Tc, Bp, _ = x_ref.shape

    @pl.when(kt == 0)
    def _():
        h_ref[...] = jnp.zeros_like(h_ref)
        c_ref[...] = jnp.zeros_like(c_ref)

    # ---- fused input projection for this chunk (bias folded via the ones column) ----
    xc = x_ref[...].reshape(Tc * Bp, IN_PAD)
    xp = jnp.dot(xc, wih_ref[...], preferred_element_type=jnp.float32)
    xp_ref[...] = xp.reshape(Tc, Bp, 4 * HIDDEN)

    # ---- serial recurrence over this chunk -------------------------------------------
    # TODO(synk): drive the MXU explicitly (pltpu.matmul_push_rhs once before the loop,
    # matmul_acc_lhs/matmul_pop per step) so W_hh^T stays resident in the MXU weight
    # registers instead of being re-pushed every timestep.
    if masked:
        t0 = kt * Tc

    def step(t, carry):
        h, c = carry
        gates = xp_ref[t] + jnp.dot(
            h.astype(RECURRENT_DTYPE), whh_ref[...],
            preferred_element_type=jnp.float32)
        # layout [i | f | o | g]; the g block's pre-activation was pre-scaled by 2, so
        # tanh(g) == 2*sigmoid(2g) - 1 and one sigmoid covers the whole (Bp, 512) slab.
        sig = jax.nn.sigmoid(gates)
        i_g = sig[:, 0 * HIDDEN:1 * HIDDEN]
        f_g = sig[:, 1 * HIDDEN:2 * HIDDEN]
        o_g = sig[:, 2 * HIDDEN:3 * HIDDEN]
        g_g = 2.0 * sig[:, 3 * HIDDEN:] - 1.0
        c_new = f_g * c + i_g * g_g
        h_new = o_g * jnp.tanh(c_new)
        if masked:                                      # tail chunk: freeze padded steps
            valid = (t0 + t) < seq_len
            h_new = jnp.where(valid, h_new, h)
            c_new = jnp.where(valid, c_new, c)
        return h_new, c_new

    h, c = jax.lax.fori_loop(0, Tc, step, (h_ref[...], c_ref[...]), unroll=unroll)
    h_ref[...] = h
    c_ref[...] = c

    # ---- fused head on h_n: BatchNorm1d (train stats, valid rows) -> LeakyReLU -> fc ----
    @pl.when(kt == pl.num_programs(0) - 1)
    def _():
        hn = h_ref[...]
        row_ids = jax.lax.broadcasted_iota(jnp.int32, (Bp, 1), 0)
        mask = (row_ids < b_valid).astype(jnp.float32)
        inv_n = 1.0 / float(b_valid)
        mean = jnp.sum(hn * mask, axis=0, keepdims=True) * inv_n
        centered = (hn - mean) * mask
        var = jnp.sum(centered * centered, axis=0, keepdims=True) * inv_n
        feat = (hn - mean) * jax.lax.rsqrt(var + BN_EPS)      # BN weight=1, bias=0
        feat = jnp.where(feat >= 0, feat, LEAKY_SLOPE * feat)  # LeakyReLU
        # fc1 (128 -> 1): VPU multiply + lane reduce instead of a 1-lane MXU matmul.
        logit = jnp.sum(feat * fcw_ref[...], axis=-1, keepdims=True) + fcb_ref[0, 0]
        out_ref[...] = jax.nn.sigmoid(logit)


def _permute_gates_ifog(w):
    """PyTorch LSTM gate order [i, f, g, o] -> [i, f, o, g] along axis 0."""
    i, f, g, o = jnp.split(w, 4, axis=0)
    return jnp.concatenate([i, f, o, g], axis=0)


def lstm_forward(x_btf, params, *, interpret=False):
    """x_btf: (B, T, 3) batch-first (PyTorch convention). Returns (B, 1) float32."""
    B, T, F = x_btf.shape
    assert F == INPUT
    H4 = 4 * HIDDEN

    # f32 gate math wants 8-sublane multiples; bf16 MXU LHS packs 16 sublanes/vreg.
    Bp = 8 if B <= 8 else 16 * pl.cdiv(B, 16)

    # ---- parameters: permute to [i,f,o,g], fold bias into a ones column, pre-scale
    # the g block by 2 (tanh-via-sigmoid on the contiguous slab).
    w_ih = _permute_gates_ifog(params["w_ih"]).astype(jnp.float32)       # (512, 3)
    w_hh = _permute_gates_ifog(params["w_hh"]).astype(jnp.float32)       # (512, 128)
    bias = _permute_gates_ifog(
        (params["b_ih"] + params["b_hh"]).astype(jnp.float32))           # (512,)

    g_scale = jnp.concatenate(
        [jnp.ones((3 * HIDDEN,), jnp.float32),
         jnp.full((HIDDEN,), 2.0, jnp.float32)])[None, :]                # (1, 512)

    wih_t = jnp.zeros((IN_PAD, H4), jnp.float32)
    wih_t = wih_t.at[:INPUT, :].set(w_ih.T)
    wih_t = wih_t.at[INPUT, :].set(bias)
    wih_t = wih_t * g_scale                                              # (8, 512) f32
    whh_t = (w_hh.T * g_scale).astype(RECURRENT_DTYPE)                   # (128, 512)

    fcw = params["fc_w"].astype(jnp.float32).reshape(1, HIDDEN)          # (1, 128)
    fcb = params["fc_b"].reshape(1, 1).astype(jnp.float32)               # SMEM scalar

    # ---- generation-aware chunk sizing (v7x has half the VMEM of v5e/v6e) ------------
    try:
        vmem_cap = int(pltpu.get_tpu_info().vmem_capacity_bytes)
    except Exception:
        vmem_cap = 64 << 20                                              # v7x floor
    bytes_per_step = Bp * H4 * 4 + 2 * Bp * IN_PAD * 4    # xp scratch + dbl-buffered x
    Tc = int(min(T, max(8, (vmem_cap // 4) // bytes_per_step), 1024))
    n_chunks = pl.cdiv(T, Tc)
    Tpad = n_chunks * Tc

    # ---- augmented input: (B, T, 3) -> (Tpad, Bp, 8) with the ones/bias column -------
    x_tb = jnp.transpose(x_btf, (1, 0, 2)).astype(jnp.float32)           # (T, B, 3)
    x_aug = jnp.concatenate(
        [x_tb, jnp.ones((T, B, 1), jnp.float32),
         jnp.zeros((T, B, IN_PAD - INPUT - 1), jnp.float32)], axis=-1)   # (T, B, 8)
    x_aug = jnp.pad(x_aug, ((0, Tpad - T), (0, Bp - B), (0, 0)))

    unroll = Tc if Tc <= 32 else 8
    kernel = functools.partial(
        _lstm_head_kernel, seq_len=T, masked=(Tpad != T), b_valid=B, unroll=unroll)

    weight_bytes = (wih_t.size * 4 + whh_t.size * whh_t.dtype.itemsize
                    + fcw.size * 4 + 2 * Bp * HIDDEN * 4 + Bp * 4)
    vmem_limit = int(min(vmem_cap,
                         max(32 << 20, 2 * Tc * bytes_per_step + weight_bytes + (4 << 20))))

    # TODO(synk): on v7x, add a leading "parallel" batch grid axis (per-core BN partial
    # sums combined in a tiny second pass) so both TensorCores work on large batches.
    out = pl.pallas_call(
        kernel,
        out_shape=jax.ShapeDtypeStruct((Bp, 1), jnp.float32),
        grid=(n_chunks,),
        in_specs=[
            pl.BlockSpec((Tc, Bp, IN_PAD), lambda kt: (kt, 0, 0)),       # raw x chunk
            pl.BlockSpec((IN_PAD, H4), lambda kt: (0, 0)),               # W_ih^T (+bias)
            pl.BlockSpec((HIDDEN, H4), lambda kt: (0, 0)),               # W_hh^T bf16
            pl.BlockSpec((1, HIDDEN), lambda kt: (0, 0)),                # fc weight row
            pl.BlockSpec((1, 1), lambda kt: (0, 0),
                         memory_space=pltpu.MemorySpace.SMEM),           # fc bias
        ],
        out_specs=pl.BlockSpec((Bp, 1), lambda kt: (0, 0)),
        scratch_shapes=[
            pltpu.VMEM((Tc, Bp, H4), jnp.float32),                       # per-chunk x-proj
            pltpu.VMEM((Bp, HIDDEN), jnp.float32),                       # h carry
            pltpu.VMEM((Bp, HIDDEN), jnp.float32),                       # c carry
        ],
        compiler_params=pltpu.CompilerParams(
            dimension_semantics=("arbitrary",),
            vmem_limit_bytes=vmem_limit),
        interpret=interpret,
    )(x_aug, wih_t, whh_t, fcw, fcb)
    return out[:B]


# ---------------------------------------------------------------------------
# Pure-JAX reference (same recurrent-matmul precision) for the smoke test.
# ---------------------------------------------------------------------------
def lstm_forward_ref(x_btf, params):
    B, T, _ = x_btf.shape
    w_ih, w_hh = params["w_ih"], params["w_hh"]
    b = params["b_ih"] + params["b_hh"]
    whh_t = w_hh.T.astype(RECURRENT_DTYPE)
    h = jnp.zeros((B, HIDDEN), jnp.float32)
    c = jnp.zeros((B, HIDDEN), jnp.float32)
    for t in range(T):
        gates = (x_btf[:, t, :] @ w_ih.T + b
                 + jnp.dot(h.astype(RECURRENT_DTYPE), whh_t,
                           preferred_element_type=jnp.float32))
        i, f, g, o = jnp.split(gates, 4, axis=-1)
        i, f, o = jax.nn.sigmoid(i), jax.nn.sigmoid(f), jax.nn.sigmoid(o)
        g = jnp.tanh(g)
        c = f * c + i * g
        h = o * jnp.tanh(c)
    mean = h.mean(0, keepdims=True)
    var = ((h - mean) ** 2).mean(0, keepdims=True)
    feat = (h - mean) * jax.lax.rsqrt(var + BN_EPS)
    feat = jnp.where(feat >= 0, feat, LEAKY_SLOPE * feat)
    logit = feat @ params["fc_w"].T + params["fc_b"]
    return jax.nn.sigmoid(logit)


def xavier_normal(key, shape):
    fan_out, fan_in = shape
    std = (2.0 / (fan_in + fan_out)) ** 0.5
    return std * jax.random.normal(key, shape, dtype=jnp.float32)


def init_params(key):
    k1, k2, k3 = jax.random.split(key, 3)
    return {
        # nn.LSTM params: weight_* xavier_normal_, bias_* zeros_
        "w_ih": xavier_normal(k1, (4 * HIDDEN, INPUT)),     # (512, 3)
        "w_hh": xavier_normal(k2, (4 * HIDDEN, HIDDEN)),    # (512, 128)
        "b_ih": jnp.zeros((4 * HIDDEN,), jnp.float32),
        "b_hh": jnp.zeros((4 * HIDDEN,), jnp.float32),
        # fc1: xavier_normal_ weight, zero bias
        "fc_w": xavier_normal(k3, (1, HIDDEN)),             # (1, 128)
        "fc_b": jnp.zeros((1,), jnp.float32),
        # BatchNorm1d: weight=1, bias=0 (folded into the in-kernel normalization)
    }


if __name__ == "__main__":
    key = jax.random.PRNGKey(0)
    pkey, xkey = jax.random.split(key)
    params = init_params(pkey)

    B, T = 4, 8
    x = jax.random.normal(xkey, (B, T, INPUT), dtype=jnp.float32)

    out = jax.block_until_ready(lstm_forward(x, params))
    ref = jax.block_until_ready(lstm_forward_ref(x, params))

    assert out.shape == (B, 1)
    assert bool(jnp.all(jnp.isfinite(out)))
    assert bool(jnp.allclose(out, ref, atol=1e-2, rtol=1e-2)), (out, ref)
    print("KERNEL_OK")
</pallas_src>

<mosaic_0001>
module attributes {stable_mosaic.version = 11 : i64} {
  func.func @_lstm_head_kernel(%arg0: i32, %arg1: memref<8x8x8xf32, #tpu.memory_space<vmem>>, %arg2: memref<8x512xf32, #tpu.memory_space<vmem>>, %arg3: memref<128x512xbf16, #tpu.memory_space<vmem>>, %arg4: memref<1x128xf32, #tpu.memory_space<vmem>>, %arg5: memref<1x1xf32, #tpu.memory_space<smem>>, %arg6: memref<8x1xf32, #tpu.memory_space<vmem>>, %arg7: memref<8x8x512xf32, #tpu.memory_space<vmem>>, %arg8: memref<8x128xf32, #tpu.memory_space<vmem>>, %arg9: memref<8x128xf32, #tpu.memory_space<vmem>>) attributes {dimension_semantics = [#tpu.dimension_semantics<arbitrary>], iteration_bounds = array<i64: 1>, scalar_prefetch = 0 : i64, scratch_operands = 3 : i64, tpu.core_type = #tpu.core_type<tc>, window_params = [{transform_indices = @transform_0, window_bounds = array<i64: 8, 8, 8>}, {pipeline_mode = #tpu.pipeline_mode<synchronous>, transform_indices = @transform_1, window_bounds = array<i64: 8, 512>}, {pipeline_mode = #tpu.pipeline_mode<synchronous>, transform_indices = @transform_2, window_bounds = array<i64: 128, 512>}, {pipeline_mode = #tpu.pipeline_mode<synchronous>, transform_indices = @transform_3, window_bounds = array<i64: 1, 128>}, {transform_indices = @transform_4, window_bounds = array<i64: 1, 1>}, {pipeline_mode = #tpu.pipeline_mode<synchronous>, transform_indices = @transform_5, window_bounds = array<i64: 8, 1>}]} {
    %c0_i32 = arith.constant 0 : i32
    %0 = arith.cmpi eq, %arg0, %c0_i32 : i32
    %1 = arith.extui %0 : i1 to i32
    %c0_i32_0 = arith.constant 0 : i32
    %2 = arith.cmpi ne, %1, %c0_i32_0 : i32
    scf.if %2 {
      %cst_83 = arith.constant 0.000000e+00 : f32
      %216 = vector.broadcast %cst_83 : f32 to vector<8x128xf32>
      %c0_84 = arith.constant 0 : index
      %c0_85 = arith.constant 0 : index
      %217 = vector.load %arg8[%c0_84, %c0_85] : memref<8x128xf32, #tpu.memory_space<vmem>>, vector<8x128xf32>
      tpu.vector_store %arg8[%c0_84, %c0_85], %216 {strides = array<i32>} : memref<8x128xf32, #tpu.memory_space<vmem>>, vector<8x128xf32>,
      %cst_86 = arith.constant 0.000000e+00 : f32
      %218 = vector.broadcast %cst_86 : f32 to vector<8x128xf32>
      %c0_87 = arith.constant 0 : index
      %c0_88 = arith.constant 0 : index
      %219 = vector.load %arg9[%c0_87, %c0_88] : memref<8x128xf32, #tpu.memory_space<vmem>>, vector<8x128xf32>
      tpu.vector_store %arg9[%c0_87, %c0_88], %218 {strides = array<i32>} : memref<8x128xf32, #tpu.memory_space<vmem>>, vector<8x128xf32>,
    } else {
    }
    %c0 = arith.constant 0 : index
    %c0_1 = arith.constant 0 : index
    %c0_2 = arith.constant 0 : index
    %3 = vector.load %arg1[%c0, %c0_1, %c0_2] : memref<8x8x8xf32, #tpu.memory_space<vmem>>, vector<8x8x8xf32>
    %4 = vector.shape_cast %3 : vector<8x8x8xf32> to vector<64x8xf32>
    %c0_3 = arith.constant 0 : index
    %c0_4 = arith.constant 0 : index
    %5 = vector.load %arg2[%c0_3, %c0_4] : memref<8x512xf32, #tpu.memory_space<vmem>>, vector<8x512xf32>
    %cst = arith.constant dense<0.000000e+00> : vector<64x512xf32>
    %6 = tpu.matmul %4, %5, %cst {dimension_numbers = #tpu.dot_dimension_numbers<[1], [0], [0], [1], [0, 0, 1, 1], [], []>} : vector<64x8xf32>, vector<8x512xf32>, vector<64x512xf32> -> vector<64x512xf32>
    %7 = vector.shape_cast %6 : vector<64x512xf32> to vector<8x8x512xf32>
    %c0_5 = arith.constant 0 : index
    %c0_6 = arith.constant 0 : index
    %c0_7 = arith.constant 0 : index
    %8 = vector.load %arg7[%c0_5, %c0_6, %c0_7] : memref<8x8x512xf32, #tpu.memory_space<vmem>>, vector<8x8x512xf32>
    tpu.vector_store %arg7[%c0_5, %c0_6, %c0_7], %7 {strides = array<i32>} : memref<8x8x512xf32, #tpu.memory_space<vmem>>, vector<8x8x512xf32>,
    %c0_8 = arith.constant 0 : index
    %c0_9 = arith.constant 0 : index
    %9 = vector.load %arg8[%c0_8, %c0_9] : memref<8x128xf32, #tpu.memory_space<vmem>>, vector<8x128xf32>
    %c0_10 = arith.constant 0 : index
    %c0_11 = arith.constant 0 : index
    %10 = vector.load %arg9[%c0_10, %c0_11] : memref<8x128xf32, #tpu.memory_space<vmem>>, vector<8x128xf32>
    %c0_i32_12 = arith.constant 0 : i32
    %11 = arith.index_cast %c0_i32_12 : i32 to index
    %c0_13 = arith.constant 0 : index
    %c0_14 = arith.constant 0 : index
    %12 = vector.load %arg7[%11, %c0_13, %c0_14] : memref<8x8x512xf32, #tpu.memory_space<vmem>>, vector<1x8x512xf32>
    %13 = vector.shape_cast %12 : vector<1x8x512xf32> to vector<8x512xf32>
    %14 = arith.truncf %9 : vector<8x128xf32> to vector<8x128xbf16>
    %c0_15 = arith.constant 0 : index
    %c0_16 = arith.constant 0 : index
    %15 = vector.load %arg3[%c0_15, %c0_16] : memref<128x512xbf16, #tpu.memory_space<vmem>>, vector<128x512xbf16>
    %cst_17 = arith.constant dense<0.000000e+00> : vector<8x512xf32>
    %16 = tpu.matmul %14, %15, %cst_17 {dimension_numbers = #tpu.dot_dimension_numbers<[1], [0], [0], [1], [0, 0, 1, 1], [], []>} : vector<8x128xbf16>, vector<128x512xbf16>, vector<8x512xf32> -> vector<8x512xf32>
    %17 = arith.addf %13, %16 : vector<8x512xf32>
    %18 = arith.negf %17 : vector<8x512xf32>
    %19 = math.exp %18 : vector<8x512xf32>
    %cst_18 = arith.constant 1.000000e+00 : f32
    %20 = vector.broadcast %cst_18 : f32 to vector<8x512xf32>
    %21 = arith.addf %20, %19 : vector<8x512xf32>
    %22 = arith.divf %20, %21 : vector<8x512xf32>
    %23 = vector.extract_strided_slice %22 {offsets = [0, 0], sizes = [8, 128], strides = [1, 1]} : vector<8x512xf32> to vector<8x128xf32>
    %24 = vector.extract_strided_slice %22 {offsets = [0, 128], sizes = [8, 128], strides = [1, 1]} : vector<8x512xf32> to vector<8x128xf32>
    %25 = vector.extract_strided_slice %22 {offsets = [0, 256], sizes = [8, 128], strides = [1, 1]} : vector<8x512xf32> to vector<8x128xf32>
    %26 = vector.extract_strided_slice %22 {offsets = [0, 384], sizes = [8, 128], strides = [1, 1]} : vector<8x512xf32> to vector<8x128xf32>
    %cst_19 = arith.constant 2.000000e+00 : f32
    %27 = vector.broadcast %cst_19 : f32 to vector<8x128xf32>
    %28 = arith.mulf %27, %26 : vector<8x128xf32>
    %cst_20 = arith.constant 1.000000e+00 : f32
    %29 = vector.broadcast %cst_20 : f32 to vector<8x128xf32>
    %30 = arith.subf %28, %29 : vector<8x128xf32>
    %31 = arith.mulf %24, %10 : vector<8x128xf32>
    %32 = arith.mulf %23, %30 : vector<8x128xf32>
    %33 = arith.addf %31, %32 : vector<8x128xf32>
    %34 = math.tanh %33 : vector<8x128xf32>
    %35 = arith.mulf %25, %34 : vector<8x128xf32>
    %c1_i32 = arith.constant 1 : i32
    %36 = arith.index_cast %c1_i32 : i32 to index
    %c0_21 = arith.constant 0 : index
    %c0_22 = arith.constant 0 : index
    %37 = vector.load %arg7[%36, %c0_21, %c0_22] : memref<8x8x512xf32, #tpu.memory_space<vmem>>, vector<1x8x512xf32>
    %38 = vector.shape_cast %37 : vector<1x8x512xf32> to vector<8x512xf32>
    %39 = arith.truncf %35 : vector<8x128xf32> to vector<8x128xbf16>
    %c0_23 = arith.constant 0 : index
    %c0_24 = arith.constant 0 : index
    %40 = vector.load %arg3[%c0_23, %c0_24] : memref<128x512xbf16, #tpu.memory_space<vmem>>, vector<128x512xbf16>
    %cst_25 = arith.constant dense<0.000000e+00> : vector<8x512xf32>
    %41 = tpu.matmul %39, %40, %cst_25 {dimension_numbers = #tpu.dot_dimension_numbers<[1], [0], [0], [1], [0, 0, 1, 1], [], []>} : vector<8x128xbf16>, vector<128x512xbf16>, vector<8x512xf32> -> vector<8x512xf32>
    %42 = arith.addf %38, %41 : vector<8x512xf32>
    %43 = arith.negf %42 : vector<8x512xf32>
    %44 = math.exp %43 : vector<8x512xf32>
    %cst_26 = arith.constant 1.000000e+00 : f32
    %45 = vector.broadcast %cst_26 : f32 to vector<8x512xf32>
    %46 = arith.addf %45, %44 : vector<8x512xf32>
    %47 = arith.divf %45, %46 : vector<8x512xf32>
    %48 = vector.extract_strided_slice %47 {offsets = [0, 0], sizes = [8, 128], strides = [1, 1]} : vector<8x512xf32> to vector<8x128xf32>
    %49 = vector.extract_strided_slice %47 {offsets = [0, 128], sizes = [8, 128], strides = [1, 1]} : vector<8x512xf32> to vector<8x128xf32>
    %50 = vector.extract_strided_slice %47 {offsets = [0, 256], sizes = [8, 128], strides = [1, 1]} : vector<8x512xf32> to vector<8x128xf32>
    %51 = vector.extract_strided_slice %47 {offsets = [0, 384], sizes = [8, 128], strides = [1, 1]} : vector<8x512xf32> to vector<8x128xf32>
    %cst_27 = arith.constant 2.000000e+00 : f32
    %52 = vector.broadcast %cst_27 : f32 to vector<8x128xf32>
    %53 = arith.mulf %52, %51 : vector<8x128xf32>
    %cst_28 = arith.constant 1.000000e+00 : f32
    %54 = vector.broadcast %cst_28 : f32 to vector<8x128xf32>
    %55 = arith.subf %53, %54 : vector<8x128xf32>
    %56 = arith.mulf %49, %33 : vector<8x128xf32>
    %57 = arith.mulf %48, %55 : vector<8x128xf32>
    %58 = arith.addf %56, %57 : vector<8x128xf32>
    %59 = math.tanh %58 : vector<8x128xf32>
    %60 = arith.mulf %50, %59 : vector<8x128xf32>
    %c2_i32 = arith.constant 2 : i32
    %61 = arith.index_cast %c2_i32 : i32 to index
    %c0_29 = arith.constant 0 : index
    %c0_30 = arith.constant 0 : index
    %62 = vector.load %arg7[%61, %c0_29, %c0_30] : memref<8x8x512xf32, #tpu.memory_space<vmem>>, vector<1x8x512xf32>
    %63 = vector.shape_cast %62 : vector<1x8x512xf32> to vector<8x512xf32>
    %64 = arith.truncf %60 : vector<8x128xf32> to vector<8x128xbf16>
    %c0_31 = arith.constant 0 : index
    %c0_32 = arith.constant 0 : index
    %65 = vector.load %arg3[%c0_31, %c0_32] : memref<128x512xbf16, #tpu.memory_space<vmem>>, vector<128x512xbf16>
    %cst_33 = arith.constant dense<0.000000e+00> : vector<8x512xf32>
    %66 = tpu.matmul %64, %65, %cst_33 {dimension_numbers = #tpu.dot_dimension_numbers<[1], [0], [0], [1], [0, 0, 1, 1], [], []>} : vector<8x128xbf16>, vector<128x512xbf16>, vector<8x512xf32> -> vector<8x512xf32>
    %67 = arith.addf %63, %66 : vector<8x512xf32>
    %68 = arith.negf %67 : vector<8x512xf32>
    %69 = math.exp %68 : vector<8x512xf32>
    %cst_34 = arith.constant 1.000000e+00 : f32
    %70 = vector.broadcast %cst_34 : f32 to vector<8x512xf32>
    %71 = arith.addf %70, %69 : vector<8x512xf32>
    %72 = arith.divf %70, %71 : vector<8x512xf32>
    %73 = vector.extract_strided_slice %72 {offsets = [0, 0], sizes = [8, 128], strides = [1, 1]} : vector<8x512xf32> to vector<8x128xf32>
    %74 = vector.extract_strided_slice %72 {offsets = [0, 128], sizes = [8, 128], strides = [1, 1]} : vector<8x512xf32> to vector<8x128xf32>
    %75 = vector.extract_strided_slice %72 {offsets = [0, 256], sizes = [8, 128], strides = [1, 1]} : vector<8x512xf32> to vector<8x128xf32>
    %76 = vector.extract_strided_slice %72 {offsets = [0, 384], sizes = [8, 128], strides = [1, 1]} : vector<8x512xf32> to vector<8x128xf32>
    %cst_35 = arith.constant 2.000000e+00 : f32
    %77 = vector.broadcast %cst_35 : f32 to vector<8x128xf32>
    %78 = arith.mulf %77, %76 : vector<8x128xf32>
    %cst_36 = arith.constant 1.000000e+00 : f32
    %79 = vector.broadcast %cst_36 : f32 to vector<8x128xf32>
    %80 = arith.subf %78, %79 : vector<8x128xf32>
    %81 = arith.mulf %74, %58 : vector<8x128xf32>
    %82 = arith.mulf %73, %80 : vector<8x128xf32>
    %83 = arith.addf %81, %82 : vector<8x128xf32>
    %84 = math.tanh %83 : vector<8x128xf32>
    %85 = arith.mulf %75, %84 : vector<8x128xf32>
    %c3_i32 = arith.constant 3 : i32
    %86 = arith.index_cast %c3_i32 : i32 to index
    %c0_37 = arith.constant 0 : index
    %c0_38 = arith.constant 0 : index
    %87 = vector.load %arg7[%86, %c0_37, %c0_38] : memref<8x8x512xf32, #tpu.memory_space<vmem>>, vector<1x8x512xf32>
    %88 = vector.shape_cast %87 : vector<1x8x512xf32> to vector<8x512xf32>
    %89 = arith.truncf %85 : vector<8x128xf32> to vector<8x128xbf16>
    %c0_39 = arith.constant 0 : index
    %c0_40 = arith.constant 0 : index
    %90 = vector.load %arg3[%c0_39, %c0_40] : memref<128x512xbf16, #tpu.memory_space<vmem>>, vector<128x512xbf16>
    %cst_41 = arith.constant dense<0.000000e+00> : vector<8x512xf32>
    %91 = tpu.matmul %89, %90, %cst_41 {dimension_numbers = #tpu.dot_dimension_numbers<[1], [0], [0], [1], [0, 0, 1, 1], [], []>} : vector<8x128xbf16>, vector<128x512xbf16>, vector<8x512xf32> -> vector<8x512xf32>
    %92 = arith.addf %88, %91 : vector<8x512xf32>
    %93 = arith.negf %92 : vector<8x512xf32>
    %94 = math.exp %93 : vector<8x512xf32>
    %cst_42 = arith.constant 1.000000e+00 : f32
    %95 = vector.broadcast %cst_42 : f32 to vector<8x512xf32>
    %96 = arith.addf %95, %94 : vector<8x512xf32>
    %97 = arith.divf %95, %96 : vector<8x512xf32>
    %98 = vector.extract_strided_slice %97 {offsets = [0, 0], sizes = [8, 128], strides = [1, 1]} : vector<8x512xf32> to vector<8x128xf32>
    %99 = vector.extract_strided_slice %97 {offsets = [0, 128], sizes = [8, 128], strides = [1, 1]} : vector<8x512xf32> to vector<8x128xf32>
    %100 = vector.extract_strided_slice %97 {offsets = [0, 256], sizes = [8, 128], strides = [1, 1]} : vector<8x512xf32> to vector<8x128xf32>
    %101 = vector.extract_strided_slice %97 {offsets = [0, 384], sizes = [8, 128], strides = [1, 1]} : vector<8x512xf32> to vector<8x128xf32>
    %cst_43 = arith.constant 2.000000e+00 : f32
    %102 = vector.broadcast %cst_43 : f32 to vector<8x128xf32>
    %103 = arith.mulf %102, %101 : vector<8x128xf32>
    %cst_44 = arith.constant 1.000000e+00 : f32
    %104 = vector.broadcast %cst_44 : f32 to vector<8x128xf32>
    %105 = arith.subf %103, %104 : vector<8x128xf32>
    %106 = arith.mulf %99, %83 : vector<8x128xf32>
    %107 = arith.mulf %98, %105 : vector<8x128xf32>
    %108 = arith.addf %106, %107 : vector<8x128xf32>
    %109 = math.tanh %108 : vector<8x128xf32>
    %110 = arith.mulf %100, %109 : vector<8x128xf32>
    %c4_i32 = arith.constant 4 : i32
    %111 = arith.index_cast %c4_i32 : i32 to index
    %c0_45 = arith.constant 0 : index
    %c0_46 = arith.constant 0 : index
    %112 = vector.load %arg7[%111, %c0_45, %c0_46] : memref<8x8x512xf32, #tpu.memory_space<vmem>>, vector<1x8x512xf32>
    %113 = vector.shape_cast %112 : vector<1x8x512xf32> to vector<8x512xf32>
    %114 = arith.truncf %110 : vector<8x128xf32> to vector<8x128xbf16>
    %c0_47 = arith.constant 0 : index
    %c0_48 = arith.constant 0 : index
    %115 = vector.load %arg3[%c0_47, %c0_48] : memref<128x512xbf16, #tpu.memory_space<vmem>>, vector<128x512xbf16>
    %cst_49 = arith.constant dense<0.000000e+00> : vector<8x512xf32>
    %116 = tpu.matmul %114, %115, %cst_49 {dimension_numbers = #tpu.dot_dimension_numbers<[1], [0], [0], [1], [0, 0, 1, 1], [], []>} : vector<8x128xbf16>, vector<128x512xbf16>, vector<8x512xf32> -> vector<8x512xf32>
    %117 = arith.addf %113, %116 : vector<8x512xf32>
    %118 = arith.negf %117 : vector<8x512xf32>
    %119 = math.exp %118 : vector<8x512xf32>
    %cst_50 = arith.constant 1.000000e+00 : f32
    %120 = vector.broadcast %cst_50 : f32 to vector<8x512xf32>
    %121 = arith.addf %120, %119 : vector<8x512xf32>
    %122 = arith.divf %120, %121 : vector<8x512xf32>
    %123 = vector.extract_strided_slice %122 {offsets = [0, 0], sizes = [8, 128], strides = [1, 1]} : vector<8x512xf32> to vector<8x128xf32>
    %124 = vector.extract_strided_slice %122 {offsets = [0, 128], sizes = [8, 128], strides = [1, 1]} : vector<8x512xf32> to vector<8x128xf32>
    %125 = vector.extract_strided_slice %122 {offsets = [0, 256], sizes = [8, 128], strides = [1, 1]} : vector<8x512xf32> to vector<8x128xf32>
    %126 = vector.extract_strided_slice %122 {offsets = [0, 384], sizes = [8, 128], strides = [1, 1]} : vector<8x512xf32> to vector<8x128xf32>
    %cst_51 = arith.constant 2.000000e+00 : f32
    %127 = vector.broadcast %cst_51 : f32 to vector<8x128xf32>
    %128 = arith.mulf %127, %126 : vector<8x128xf32>
    %cst_52 = arith.constant 1.000000e+00 : f32
    %129 = vector.broadcast %cst_52 : f32 to vector<8x128xf32>
    %130 = arith.subf %128, %129 : vector<8x128xf32>
    %131 = arith.mulf %124, %108 : vector<8x128xf32>
    %132 = arith.mulf %123, %130 : vector<8x128xf32>
    %133 = arith.addf %131, %132 : vector<8x128xf32>
    %134 = math.tanh %133 : vector<8x128xf32>
    %135 = arith.mulf %125, %134 : vector<8x128xf32>
    %c5_i32 = arith.constant 5 : i32
    %136 = arith.index_cast %c5_i32 : i32 to index
    %c0_53 = arith.constant 0 : index
    %c0_54 = arith.constant 0 : index
    %137 = vector.load %arg7[%136, %c0_53, %c0_54] : memref<8x8x512xf32, #tpu.memory_space<vmem>>, vector<1x8x512xf32>
    %138 = vector.shape_cast %137 : vector<1x8x512xf32> to vector<8x512xf32>
    %139 = arith.truncf %135 : vector<8x128xf32> to vector<8x128xbf16>
    %c0_55 = arith.constant 0 : index
    %c0_56 = arith.constant 0 : index
    %140 = vector.load %arg3[%c0_55, %c0_56] : memref<128x512xbf16, #tpu.memory_space<vmem>>, vector<128x512xbf16>
    %cst_57 = arith.constant dense<0.000000e+00> : vector<8x512xf32>
    %141 = tpu.matmul %139, %140, %cst_57 {dimension_numbers = #tpu.dot_dimension_numbers<[1], [0], [0], [1], [0, 0, 1, 1], [], []>} : vector<8x128xbf16>, vector<128x512xbf16>, vector<8x512xf32> -> vector<8x512xf32>
    %142 = arith.addf %138, %141 : vector<8x512xf32>
    %143 = arith.negf %142 : vector<8x512xf32>
    %144 = math.exp %143 : vector<8x512xf32>
    %cst_58 = arith.constant 1.000000e+00 : f32
    %145 = vector.broadcast %cst_58 : f32 to vector<8x512xf32>
    %146 = arith.addf %145, %144 : vector<8x512xf32>
    %147 = arith.divf %145, %146 : vector<8x512xf32>
    %148 = vector.extract_strided_slice %147 {offsets = [0, 0], sizes = [8, 128], strides = [1, 1]} : vector<8x512xf32> to vector<8x128xf32>
    %149 = vector.extract_strided_slice %147 {offsets = [0, 128], sizes = [8, 128], strides = [1, 1]} : vector<8x512xf32> to vector<8x128xf32>
    %150 = vector.extract_strided_slice %147 {offsets = [0, 256], sizes = [8, 128], strides = [1, 1]} : vector<8x512xf32> to vector<8x128xf32>
    %151 = vector.extract_strided_slice %147 {offsets = [0, 384], sizes = [8, 128], strides = [1, 1]} : vector<8x512xf32> to vector<8x128xf32>
    %cst_59 = arith.constant 2.000000e+00 : f32
    %152 = vector.broadcast %cst_59 : f32 to vector<8x128xf32>
    %153 = arith.mulf %152, %151 : vector<8x128xf32>
    %cst_60 = arith.constant 1.000000e+00 : f32
    %154 = vector.broadcast %cst_60 : f32 to vector<8x128xf32>
    %155 = arith.subf %153, %154 : vector<8x128xf32>
    %156 = arith.mulf %149, %133 : vector<8x128xf32>
    %157 = arith.mulf %148, %155 : vector<8x128xf32>
    %158 = arith.addf %156, %157 : vector<8x128xf32>
    %159 = math.tanh %158 : vector<8x128xf32>
    %160 = arith.mulf %150, %159 : vector<8x128xf32>
    %c6_i32 = arith.constant 6 : i32
    %161 = arith.index_cast %c6_i32 : i32 to index
    %c0_61 = arith.constant 0 : index
    %c0_62 = arith.constant 0 : index
    %162 = vector.load %arg7[%161, %c0_61, %c0_62] : memref<8x8x512xf32, #tpu.memory_space<vmem>>, vector<1x8x512xf32>
    %163 = vector.shape_cast %162 : vector<1x8x512xf32> to vector<8x512xf32>
    %164 = arith.truncf %160 : vector<8x128xf32> to vector<8x128xbf16>
    %c0_63 = arith.constant 0 : index
    %c0_64 = arith.constant 0 : index
    %165 = vector.load %arg3[%c0_63, %c0_64] : memref<128x512xbf16, #tpu.memory_space<vmem>>, vector<128x512xbf16>
    %cst_65 = arith.constant dense<0.000000e+00> : vector<8x512xf32>
    %166 = tpu.matmul %164, %165, %cst_65 {dimension_numbers = #tpu.dot_dimension_numbers<[1], [0], [0], [1], [0, 0, 1, 1], [], []>} : vector<8x128xbf16>, vector<128x512xbf16>, vector<8x512xf32> -> vector<8x512xf32>
    %167 = arith.addf %163, %166 : vector<8x512xf32>
    %168 = arith.negf %167 : vector<8x512xf32>
    %169 = math.exp %168 : vector<8x512xf32>
    %cst_66 = arith.constant 1.000000e+00 : f32
    %170 = vector.broadcast %cst_66 : f32 to vector<8x512xf32>
    %171 = arith.addf %170, %169 : vector<8x512xf32>
    %172 = arith.divf %170, %171 : vector<8x512xf32>
    %173 = vector.extract_strided_slice %172 {offsets = [0, 0], sizes = [8, 128], strides = [1, 1]} : vector<8x512xf32> to vector<8x128xf32>
    %174 = vector.extract_strided_slice %172 {offsets = [0, 128], sizes = [8, 128], strides = [1, 1]} : vector<8x512xf32> to vector<8x128xf32>
    %175 = vector.extract_strided_slice %172 {offsets = [0, 256], sizes = [8, 128], strides = [1, 1]} : vector<8x512xf32> to vector<8x128xf32>
    %176 = vector.extract_strided_slice %172 {offsets = [0, 384], sizes = [8, 128], strides = [1, 1]} : vector<8x512xf32> to vector<8x128xf32>
    %cst_67 = arith.constant 2.000000e+00 : f32
    %177 = vector.broadcast %cst_67 : f32 to vector<8x128xf32>
    %178 = arith.mulf %177, %176 : vector<8x128xf32>
    %cst_68 = arith.constant 1.000000e+00 : f32
    %179 = vector.broadcast %cst_68 : f32 to vector<8x128xf32>
    %180 = arith.subf %178, %179 : vector<8x128xf32>
    %181 = arith.mulf %174, %158 : vector<8x128xf32>
    %182 = arith.mulf %173, %180 : vector<8x128xf32>
    %183 = arith.addf %181, %182 : vector<8x128xf32>
    %184 = math.tanh %183 : vector<8x128xf32>
    %185 = arith.mulf %175, %184 : vector<8x128xf32>
    %c7_i32 = arith.constant 7 : i32
    %186 = arith.index_cast %c7_i32 : i32 to index
    %c0_69 = arith.constant 0 : index
    %c0_70 = arith.constant 0 : index
    %187 = vector.load %arg7[%186, %c0_69, %c0_70] : memref<8x8x512xf32, #tpu.memory_space<vmem>>, vector<1x8x512xf32>
    %188 = vector.shape_cast %187 : vector<1x8x512xf32> to vector<8x512xf32>
    %189 = arith.truncf %185 : vector<8x128xf32> to vector<8x128xbf16>
    %c0_71 = arith.constant 0 : index
    %c0_72 = arith.constant 0 : index
    %190 = vector.load %arg3[%c0_71, %c0_72] : memref<128x512xbf16, #tpu.memory_space<vmem>>, vector<128x512xbf16>
    %cst_73 = arith.constant dense<0.000000e+00> : vector<8x512xf32>
    %191 = tpu.matmul %189, %190, %cst_73 {dimension_numbers = #tpu.dot_dimension_numbers<[1], [0], [0], [1], [0, 0, 1, 1], [], []>} : vector<8x128xbf16>, vector<128x512xbf16>, vector<8x512xf32> -> vector<8x512xf32>
    %192 = arith.addf %188, %191 : vector<8x512xf32>
    %193 = arith.negf %192 : vector<8x512xf32>
    %194 = math.exp %193 : vector<8x512xf32>
    %cst_74 = arith.constant 1.000000e+00 : f32
    %195 = vector.broadcast %cst_74 : f32 to vector<8x512xf32>
    %196 = arith.addf %195, %194 : vector<8x512xf32>
    %197 = arith.divf %195, %196 : vector<8x512xf32>
    %198 = vector.extract_strided_slice %197 {offsets = [0, 0], sizes = [8, 128], strides = [1, 1]} : vector<8x512xf32> to vector<8x128xf32>
    %199 = vector.extract_strided_slice %197 {offsets = [0, 128], sizes = [8, 128], strides = [1, 1]} : vector<8x512xf32> to vector<8x128xf32>
    %200 = vector.extract_strided_slice %197 {offsets = [0, 256], sizes = [8, 128], strides = [1, 1]} : vector<8x512xf32> to vector<8x128xf32>
    %201 = vector.extract_strided_slice %197 {offsets = [0, 384], sizes = [8, 128], strides = [1, 1]} : vector<8x512xf32> to vector<8x128xf32>
    %cst_75 = arith.constant 2.000000e+00 : f32
    %202 = vector.broadcast %cst_75 : f32 to vector<8x128xf32>
    %203 = arith.mulf %202, %201 : vector<8x128xf32>
    %cst_76 = arith.constant 1.000000e+00 : f32
    %204 = vector.broadcast %cst_76 : f32 to vector<8x128xf32>
    %205 = arith.subf %203, %204 : vector<8x128xf32>
    %206 = arith.mulf %199, %183 : vector<8x128xf32>
    %207 = arith.mulf %198, %205 : vector<8x128xf32>
    %208 = arith.addf %206, %207 : vector<8x128xf32>
    %209 = math.tanh %208 : vector<8x128xf32>
    %210 = arith.mulf %200, %209 : vector<8x128xf32>
    %c8_i32 = arith.constant 8 : i32
    %c0_77 = arith.constant 0 : index
    %c0_78 = arith.constant 0 : index
    %211 = vector.load %arg8[%c0_77, %c0_78] : memref<8x128xf32, #tpu.memory_space<vmem>>, vector<8x128xf32>
    tpu.vector_store %arg8[%c0_77, %c0_78], %210 {strides = array<i32>} : memref<8x128xf32, #tpu.memory_space<vmem>>, vector<8x128xf32>,
    %c0_79 = arith.constant 0 : index
    %c0_80 = arith.constant 0 : index
    %212 = vector.load %arg9[%c0_79, %c0_80] : memref<8x128xf32, #tpu.memory_space<vmem>>, vector<8x128xf32>
    tpu.vector_store %arg9[%c0_79, %c0_80], %208 {strides = array<i32>} : memref<8x128xf32, #tpu.memory_space<vmem>>, vector<8x128xf32>,
    %c0_i32_81 = arith.constant 0 : i32
    %213 = arith.cmpi eq, %arg0, %c0_i32_81 : i32
    %214 = arith.extui %213 : i1 to i32
    %c0_i32_82 = arith.constant 0 : i32
    %215 = arith.cmpi ne, %214, %c0_i32_82 : i32
    scf.if %215 {
      %c0_83 = arith.constant 0 : index
      %c0_84 = arith.constant 0 : index
      %216 = vector.load %arg8[%c0_83, %c0_84] : memref<8x128xf32, #tpu.memory_space<vmem>>, vector<8x128xf32>
      %217 = tpu.iota {dimensions = array<i32: 0>} : vector<8x1xi32>
      %c4_i32_85 = arith.constant 4 : i32
      %218 = vector.broadcast %c4_i32_85 : i32 to vector<8x1xi32>
      %219 = arith.cmpi slt, %217, %218 : vector<8x1xi32>
      %220 = arith.extui %219 : vector<8x1xi1> to vector<8x1xi32>
      %221 = arith.sitofp %220 : vector<8x1xi32> to vector<8x1xf32>
      %222 = vector.broadcast %221 : vector<8x1xf32> to vector<8x128xf32>
      %223 = arith.mulf %216, %222 : vector<8x128xf32>
      %cst_86 = arith.constant dense<0.000000e+00> : vector<128xf32>
      %224 = vector.multi_reduction <add>, %223, %cst_86 [0] : vector<8x128xf32> to vector<128xf32>
      %225 = vector.shape_cast %224 : vector<128xf32> to vector<1x128xf32>
      %cst_87 = arith.constant 2.500000e-01 : f32
      %226 = vector.broadcast %cst_87 : f32 to vector<1x128xf32>
      %227 = arith.mulf %225, %226 : vector<1x128xf32>
      %228 = vector.broadcast %227 : vector<1x128xf32> to vector<8x128xf32>
      %229 = arith.subf %216, %228 : vector<8x128xf32>
      %230 = vector.broadcast %221 : vector<8x1xf32> to vector<8x128xf32>
      %231 = arith.mulf %229, %230 : vector<8x128xf32>
      %232 = arith.mulf %231, %231 : vector<8x128xf32>
      %cst_88 = arith.constant dense<0.000000e+00> : vector<128xf32>
      %233 = vector.multi_reduction <add>, %232, %cst_88 [0] : vector<8x128xf32> to vector<128xf32>
      %234 = vector.shape_cast %233 : vector<128xf32> to vector<1x128xf32>
      %cst_89 = arith.constant 2.500000e-01 : f32
      %235 = vector.broadcast %cst_89 : f32 to vector<1x128xf32>
      %236 = arith.mulf %234, %235 : vector<1x128xf32>
      %237 = vector.broadcast %227 : vector<1x128xf32> to vector<8x128xf32>
      %238 = arith.subf %216, %237 : vector<8x128xf32>
      %cst_90 = arith.constant 9.99999974E-6 : f32
      %239 = vector.broadcast %cst_90 : f32 to vector<1x128xf32>
      %240 = arith.addf %236, %239 : vector<1x128xf32>
      %241 = math.rsqrt %240 : vector<1x128xf32>
      %242 = vector.broadcast %241 : vector<1x128xf32> to vector<8x128xf32>
      %243 = arith.mulf %238, %242 : vector<8x128xf32>
      %cst_91 = arith.constant 0.000000e+00 : f32
      %244 = vector.broadcast %cst_91 : f32 to vector<8x128xf32>
      %245 = arith.cmpf oge, %243, %244 : vector<8x128xf32>
      %cst_92 = arith.constant 0.00999999977 : f32
      %246 = vector.broadcast %cst_92 : f32 to vector<8x128xf32>
      %247 = arith.mulf %246, %243 : vector<8x128xf32>
      %248 = arith.select %245, %243, %247 : vector<8x128xi1>, vector<8x128xf32>
      %c0_93 = arith.constant 0 : index
      %c0_94 = arith.constant 0 : index
      %249 = vector.load %arg4[%c0_93, %c0_94] : memref<1x128xf32, #tpu.memory_space<vmem>>, vector<1x128xf32>
      %250 = vector.broadcast %249 : vector<1x128xf32> to vector<8x128xf32>
      %251 = arith.mulf %248, %250 : vector<8x128xf32>
      %cst_95 = arith.constant dense<0.000000e+00> : vector<8xf32>
      %252 = vector.multi_reduction <add>, %251, %cst_95 [1] : vector<8x128xf32> to vector<8xf32>
      %253 = vector.shape_cast %252 : vector<8xf32> to vector<8x1xf32>
      %c0_96 = arith.constant 0 : index
      %c0_97 = arith.constant 0 : index
      %254 = memref.load %arg5[%c0_96, %c0_97] : memref<1x1xf32, #tpu.memory_space<smem>>
      %255 = vector.broadcast %254 : f32 to vector<8x1xf32>
      %256 = arith.addf %253, %255 : vector<8x1xf32>
      %257 = arith.negf %256 : vector<8x1xf32>
      %258 = math.exp %257 : vector<8x1xf32>
      %cst_98 = arith.constant 1.000000e+00 : f32
      %259 = vector.broadcast %cst_98 : f32 to vector<8x1xf32>
      %260 = arith.addf %259, %258 : vector<8x1xf32>
      %261 = arith.divf %259, %260 : vector<8x1xf32>
      %c0_99 = arith.constant 0 : index
      %c0_100 = arith.constant 0 : index
      %262 = vector.load %arg6[%c0_99, %c0_100] : memref<8x1xf32, #tpu.memory_space<vmem>>, vector<8x1xf32>
      tpu.vector_store %arg6[%c0_99, %c0_100], %261 {strides = array<i32>} : memref<8x1xf32, #tpu.memory_space<vmem>>, vector<8x1xf32>,
    } else {
    }
    return
  }
  func.func @transform_0(%arg0: i32) -> (i32, i32, i32) {
    %c0_i32 = arith.constant 0 : i32
    %c0_i32_0 = arith.constant 0 : i32
    %c0_i32_1 = arith.constant 0 : i32
    return %arg0, %c0_i32, %c0_i32_0 : i32, i32, i32
  }
  func.func @transform_1(%arg0: i32) -> (i32, i32) {
    %c0_i32 = arith.constant 0 : i32
    %c0_i32_0 = arith.constant 0 : i32
    %c0_i32_1 = arith.constant 0 : i32
    return %c0_i32, %c0_i32_0 : i32, i32
  }
  func.func @transform_2(%arg0: i32) -> (i32, i32) {
    %c0_i32 = arith.constant 0 : i32
    %c0_i32_0 = arith.constant 0 : i32
    %c0_i32_1 = arith.constant 0 : i32
    return %c0_i32, %c0_i32_0 : i32, i32
  }
  func.func @transform_3(%arg0: i32) -> (i32, i32) {
    %c0_i32 = arith.constant 0 : i32
    %c0_i32_0 = arith.constant 0 : i32
    %c0_i32_1 = arith.constant 0 : i32
    return %c0_i32, %c0_i32_0 : i32, i32
  }
  func.func @transform_4(%arg0: i32) -> (i32, i32) {
    %c0_i32 = arith.constant 0 : i32
    %c0_i32_0 = arith.constant 0 : i32
    %c0_i32_1 = arith.constant 0 : i32
    return %c0_i32, %c0_i32_0 : i32, i32
  }
  func.func @transform_5(%arg0: i32) -> (i32, i32) {
    %c0_i32 = arith.constant 0 : i32
    %c0_i32_0 = arith.constant 0 : i32
    %c0_i32_1 = arith.constant 0 : i32
    return %c0_i32, %c0_i32_0 : i32, i32
  }
}

</mosaic_0001>

<llo_original>
// kernel: tpu_custom_call.1
$region0: #{tpu_custom_call.1}
  #allocation0 [shape = 'u32[]', space=smem, size = 0x4, offset = 0x4, fixed_abs, tag = 'smem constant byte address 0x4 - core index']
  #allocation1 [shape = 'u32[144,128]{1,0:T(1,128)}', space=vmem, size = 0x12000, scoped, tag = 'internal scratch']
  #allocation2 [shape = 'f32[8,8,512]{2,1,0:T(8,128)}', space=vmem, size = 0x20000, scoped, tag = 'scratch operand']
  #allocation3 [shape = 'f32[8,128]{1,0:T(8,128)}', space=vmem, size = 0x1000, scoped, tag = 'scratch operand']
  #allocation4 [shape = 'f32[8,128]{1,0:T(8,128)}', space=vmem, size = 0x1000, scoped, tag = 'scratch operand']
  #allocation5 [shape = 'f32[1,1]{1,0:T(1,128)S(6)}', space=smem, size = 0x200, scoped, tag = 'scoped memory for tpu_custom_call.1']
  %s0 = inlined_call_operand.hbm [shape: f32[8,8,8], index: 0, kind: input, shape index: {}]
  %s1 = inlined_call_operand.hbm [shape: f32[8,512], index: 1, kind: input, shape index: {}]
  %s2 = inlined_call_operand.hbm [shape: bf16[128,512], index: 2, kind: input, shape index: {}]
  %s3 = inlined_call_operand.vmem [shape: f32[1,128], index: 3, kind: input, shape index: {}]
  %s4 = inlined_call_operand.<no memory space> [shape: f32[1,1], index: 4, kind: input, shape index: {}]
  %s5 = inlined_call_operand.vmem [shape: f32[8,1], index: 5, kind: output, shape index: {}]
  %s6 = sld [smem:[#allocation0]]
  $region50: #{tpu_custom_call.1} parent=0
    _
  %s8 = ssub.s32 1, %s6
  %s9 = scalar_select 0, %s8, %s6
  %10 = sst [smem:[#allocation5]] %s4
  $region1: #{tpu_custom_call.1} parent=0
    #allocation6 [shape = 'u8[32768]{0}', space=vmem, size = 0x8000, scoped, tag = 'input window, operand 0, single buffered']
    #allocation7 [shape = 's32[1]{0}', space=sflag, size = 0x4, scoped, tag = 'scoped memory for tpu_custom_call.1']
    #allocation8 [shape = 'u8[16384]{0}', space=vmem, size = 0x4000, scoped, tag = 'input window, operand 1, single buffered']
    #allocation9 [shape = 's32[1]{0}', space=sflag, size = 0x4, scoped, tag = 'scoped memory for tpu_custom_call.1']
    #allocation10 [shape = 'u8[131072]{0}', space=vmem, size = 0x20000, scoped, tag = 'input window, operand 2, single buffered']
    %11 = vsyncpa [#allocation7], 0
    %12 = vsyncpa [#allocation9], 0
    // Predicated region
    $region2: #{tpu_custom_call.1} parent=1 // pred_check
      _
    $region3: #{tpu_custom_call.1} parent=1 // pred_check_branch
      %14 = sbr.rel (0) target = $region5
    $region4: #{tpu_custom_call.1} parent=1 // pred_region
      %s16 = ssub.s32 1024, 1024
      %17 = vsyncadd [#allocation7], %s16
      %s18 = sshll.u32 [#allocation6], 4
      %s19 = int_to_ptr.vmem [resolvable:$true] %s18
      %24 = dma.hbm_to_vmem [thread:$0]  %s0, 1024, %s19, [#allocation7], 128, 128, 8
    $region5: #{tpu_custom_call.1} parent=1 // pred_fallthru
      _
    // Predicated region
    $region6: #{tpu_custom_call.1} parent=1 // pred_check
      _
    $region7: #{tpu_custom_call.1} parent=1 // pred_check_branch
      %26 = sbr.rel (0) target = $region9
    $region8: #{tpu_custom_call.1} parent=1 // pred_region
      %s28 = ssub.s32 512, 512
      %29 = vsyncadd [#allocation9], %s28
      %s31 = sshll.u32 [#allocation8], 4
      %s32 = int_to_ptr.vmem [resolvable:$true] %s31
      %34 = dma.hbm_to_vmem [thread:$0]  %s1, 512, %s32, [#allocation9]
    $region9: #{tpu_custom_call.1} parent=1 // pred_fallthru
      _
    // Predicated region
    $region10: #{tpu_custom_call.1} parent=1 // pred_check
      _
    $region11: #{tpu_custom_call.1} parent=1 // pred_check_branch
      %36 = sbr.rel (0) target = $region13
    $region12: #{tpu_custom_call.1} parent=1 // pred_region
      %s38 = ssub.s32 4096, 4096
      %39 = vsyncadd [#allocation9], %s38
      %s40 = sshll.u32 [#allocation10], 4
      %s41 = int_to_ptr.vmem [resolvable:$true] %s40
      %46 = dma.hbm_to_vmem [thread:$0]  %s2, 4096, %s41, [#allocation9], 256, 256, 16
    $region13: #{tpu_custom_call.1} parent=1 // pred_fallthru
      _
    // Predicated region
    $region14: #{tpu_custom_call.1} parent=1 // pred_check
      _
    $region15: #{tpu_custom_call.1} parent=1 // pred_check_branch
      %48 = sbr.rel (0) target = $region17
    $region16: #{tpu_custom_call.1} parent=1 // pred_region
      _
    $region17: #{tpu_custom_call.1} parent=1 // pred_fallthru
      _
    // Predicated region
    $region18: #{tpu_custom_call.1} parent=1 // pred_check
      _
    $region19: #{tpu_custom_call.1} parent=1 // pred_check_branch
      %50 = sbr.rel (0) target = $region21
    $region20: #{tpu_custom_call.1} parent=1 // pred_region
      _
    $region21: #{tpu_custom_call.1} parent=1 // pred_fallthru
      _
    // Predicated region
    $region22: #{tpu_custom_call.1} parent=1 // pred_check
      _
    $region23: #{tpu_custom_call.1} parent=1 // pred_check_branch
      %52 = sbr.rel (0) target = $region25
    $region24: #{tpu_custom_call.1} parent=1 // pred_region
      %53 = dma.done [#allocation7], 1024
    $region25: #{tpu_custom_call.1} parent=1 // pred_fallthru
      _
    // Predicated region
    $region26: #{tpu_custom_call.1} parent=1 // pred_check
      _
    $region27: #{tpu_custom_call.1} parent=1 // pred_check_branch
      %55 = sbr.rel (0) target = $region29
    $region28: #{tpu_custom_call.1} parent=1 // pred_region
      %56 = dma.done [#allocation9], 512
    $region29: #{tpu_custom_call.1} parent=1 // pred_fallthru
      _
    // Predicated region
    $region30: #{tpu_custom_call.1} parent=1 // pred_check
      _
    $region31: #{tpu_custom_call.1} parent=1 // pred_check_branch
      %58 = sbr.rel (0) target = $region33
    $region32: #{tpu_custom_call.1} parent=1 // pred_region
      %59 = dma.done [#allocation9], 4096
    $region33: #{tpu_custom_call.1} parent=1 // pred_fallthru
      _
    %p61 = scmp.eq.s32.totalorder 0, 0
    // Predicated region
    $region34: #{tpu_custom_call.1} parent=1 // pred_check
      %p62 = pneg %p61
    $region35: #{tpu_custom_call.1} parent=1 // pred_check_branch
      %64 = sbr.rel (%p62) target = $region37
    $region36: #{tpu_custom_call.1} parent=1 // pred_region
      %65 = vst [vmem:[#allocation3] sm:$0xff] 0.0
      %66 = vst [vmem:[#allocation4] sm:$0xff] 0.0
    $region37: #{tpu_custom_call.1} parent=1 // pred_fallthru
      _
    %v67 = vld [vmem:[#allocation6] sm:$0xff]
    %v68 = vld [vmem:[#allocation6 + $0x8] sm:$0xff]
    %v69 = vld [vmem:[#allocation6 + $0x10] sm:$0xff]
    %v70 = vld [vmem:[#allocation6 + $0x18] sm:$0xff]
    %v71 = vld [vmem:[#allocation6 + $0x20] sm:$0xff]
    %v72 = vld [vmem:[#allocation6 + $0x28] sm:$0xff]
    %v73 = vld [vmem:[#allocation6 + $0x30] sm:$0xff]
    %v74 = vld [vmem:[#allocation6 + $0x38] sm:$0xff]
    %v75 = vld [vmem:[#allocation8] sm:$0xff]
    %v76 = vld [vmem:[#allocation8 + $0x8] sm:$0xff]
    %v77 = vld [vmem:[#allocation8 + $0x10] sm:$0xff]
    %v78 = vld [vmem:[#allocation8 + $0x18] sm:$0xff]
    %vm79 = vcmask 64512
    %v81 = vsel %vm79, %v67, 0
    %v84 = vsel %vm79, %v68, 0
    %v87 = vsel %vm79, %v69, 0
    %v90 = vsel %vm79, %v70, 0
    %v93 = vsel %vm79, %v71, 0
    %v96 = vsel %vm79, %v72, 0
    %v99 = vsel %vm79, %v73, 0
    %v102 = vsel %vm79, %v74, 0
    %104 = vmatprep.subr.mxu0 %v76
    %105 = vmatpush1.msra.mxu0 %v75
    %106 = vmatprep.subr.mxu0 0.0
    %107 = vmatpush1.msra.mxu0 0.0
    %108 = vmatprep.subr.mxu0 0.0
    %109 = vmatpush1.msra.mxu0 0.0
    %110 = vmatprep.subr.mxu0 0.0
    %111 = vmatpush1.msra.mxu0 0.0
    %112 = vmatprep.subr.mxu0 0.0
    %113 = vmatpush1.msra.mxu0 0.0
    %114 = vmatprep.subr.mxu0 0.0
    %115 = vmatpush1.msra.mxu0 0.0
    %116 = vmatprep.subr.mxu0 0.0
    %117 = vmatpush1.msra.mxu0 0.0
    %118 = vmatprep.subr.mxu0 0.0
    %119 = vmatpush1.msra.mxu0 0.0
    %120 = vmatprep.subr.mxu0 0.0
    %121 = vmatpush1.msra.mxu0 0.0
    %122 = vmatprep.subr.mxu0 0.0
    %123 = vmatpush1.msra.mxu0 0.0
    %124 = vmatprep.subr.mxu0 0.0
    %125 = vmatpush1.msra.mxu0 0.0
    %126 = vmatprep.subr.mxu0 0.0
    %127 = vmatpush1.msra.mxu0 0.0
    %128 = vmatprep.subr.mxu0 0.0
    %129 = vmatpush1.msra.mxu0 0.0
    %130 = vmatprep.subr.mxu0 0.0
    %131 = vmatpush1.msra.mxu0 0.0
    %132 = vmatprep.subr.mxu0 0.0
    %133 = vmatpush1.msra.mxu0 0.0
    %134 = vmatprep.subr.mxu0 0.0
    %135 = vmatpush1.msra.mxu0 0.0
    %136 = vmatprep.subr.mxu0 0.0
    %137 = vmatpush1.msra.mxu0 0.0
    %138 = vmatprep.subr.mxu0 0.0
    %139 = vmatpush1.msra.mxu0 0.0
    %140 = vmatprep.subr.mxu0 0.0
    %141 = vmatpush1.msra.mxu0 0.0
    %142 = vmatprep.subr.mxu0 0.0
    %143 = vmatpush1.msra.mxu0 0.0
    %144 = vmatprep.subr.mxu0 0.0
    %145 = vmatpush1.msra.mxu0 0.0
    %146 = vmatprep.subr.mxu0 0.0
    %147 = vmatpush1.msra.mxu0 0.0
    %148 = vmatprep.subr.mxu0 0.0
    %149 = vmatpush1.msra.mxu0 0.0
    %150 = vmatprep.subr.mxu0 0.0
    %151 = vmatpush1.msra.mxu0 0.0
    %152 = vmatprep.subr.mxu0 0.0
    %153 = vmatpush1.msra.mxu0 0.0
    %154 = vmatprep.subr.mxu0 0.0
    %155 = vmatpush1.msra.mxu0 0.0
    %156 = vmatprep.subr.mxu0 0.0
    %157 = vmatpush1.msra.mxu0 0.0
    %158 = vmatprep.subr.mxu0 0.0
    %159 = vmatpush1.msra.mxu0 0.0
    %160 = vmatprep.subr.mxu0 0.0
    %161 = vmatpush1.msra.mxu0 0.0
    %162 = vmatprep.subr.mxu0 0.0
    %163 = vmatpush1.msra.mxu0 0.0
    %164 = vmatprep.subr.mxu0 0.0
    %165 = vmatpush1.msra.mxu0 0.0
    %166 = vmatprep.subr.mxu0 0.0
    %167 = vmatpush1.msra.mxu0 0.0
    %168 = vmatprep.mubr.f32.mxu0 0.0
    %169 = vmatmul.mubr.f32.gmra.mrb[0].mxu0 %v81
    %v170 = vpop.f32.mrb[0].mxu0
    %v171 = vadd.f32 0.0, %v170
    %v172 = vpop.f32.mrb[0].mxu0
    %v173 = vadd.f32 0.0, %v172
    %174 = vmatprep.mubr.f32.mxu0 0.0
    %175 = vmatmul.mubr.f32.gmra.mrb[0].mxu0 %v84
    %v176 = vpop.f32.mrb[0].mxu0
    %v177 = vadd.f32 0.0, %v176
    %v178 = vpop.f32.mrb[0].mxu0
    %v179 = vadd.f32 0.0, %v178
    %180 = vmatprep.mubr.f32.mxu0 0.0
    %181 = vmatmul.mubr.f32.gmra.mrb[0].mxu0 %v87
    %v182 = vpop.f32.mrb[0].mxu0
    %v183 = vadd.f32 0.0, %v182
    %v184 = vpop.f32.mrb[0].mxu0
    %v185 = vadd.f32 0.0, %v184
    %186 = vmatprep.mubr.f32.mxu0 0.0
    %187 = vmatmul.mubr.f32.gmra.mrb[0].mxu0 %v90
    %v188 = vpop.f32.mrb[0].mxu0
    %v189 = vadd.f32 0.0, %v188
    %v190 = vpop.f32.mrb[0].mxu0
    %v191 = vadd.f32 0.0, %v190
    %192 = vmatprep.mubr.f32.mxu0 0.0
    %193 = vmatmul.mubr.f32.gmra.mrb[0].mxu0 %v93
    %v194 = vpop.f32.mrb[0].mxu0
    %v195 = vadd.f32 0.0, %v194
    %v196 = vpop.f32.mrb[0].mxu0
    %v197 = vadd.f32 0.0, %v196
    %198 = vmatprep.mubr.f32.mxu0 0.0
    %199 = vmatmul.mubr.f32.gmra.mrb[0].mxu0 %v96
    %v200 = vpop.f32.mrb[0].mxu0
    %v201 = vadd.f32 0.0, %v200
    %v202 = vpop.f32.mrb[0].mxu0
    %v203 = vadd.f32 0.0, %v202
    %204 = vmatprep.mubr.f32.mxu0 0.0
    %205 = vmatmul.mubr.f32.gmra.mrb[0].mxu0 %v99
    %v206 = vpop.f32.mrb[0].mxu0
    %v207 = vadd.f32 0.0, %v206
    %v208 = vpop.f32.mrb[0].mxu0
    %v209 = vadd.f32 0.0, %v208
    %210 = vmatprep.mubr.f32.mxu0 0.0
    %211 = vmatmul.mubr.f32.gmra.mrb[0].mxu0 %v102
    %v212 = vpop.f32.mrb[0].mxu0
    %v213 = vadd.f32 0.0, %v212
    %v214 = vpop.f32.mrb[0].mxu0
    %v215 = vadd.f32 0.0, %v214
    %216 = vdwg.mxu0
    %217 = vmatprep.subr.mxu0 %v78
    %218 = vmatpush1.msra.mxu0 %v77
    %219 = vmatprep.subr.mxu0 0.0
    %220 = vmatpush1.msra.mxu0 0.0
    %221 = vmatprep.subr.mxu0 0.0
    %222 = vmatpush1.msra.mxu0 0.0
    %223 = vmatprep.subr.mxu0 0.0
    %224 = vmatpush1.msra.mxu0 0.0
    %225 = vmatprep.subr.mxu0 0.0
    %226 = vmatpush1.msra.mxu0 0.0
    %227 = vmatprep.subr.mxu0 0.0
    %228 = vmatpush1.msra.mxu0 0.0
    %229 = vmatprep.subr.mxu0 0.0
    %230 = vmatpush1.msra.mxu0 0.0
    %231 = vmatprep.subr.mxu0 0.0
    %232 = vmatpush1.msra.mxu0 0.0
    %233 = vmatprep.subr.mxu0 0.0
    %234 = vmatpush1.msra.mxu0 0.0
    %235 = vmatprep.subr.mxu0 0.0
    %236 = vmatpush1.msra.mxu0 0.0
    %237 = vmatprep.subr.mxu0 0.0
    %238 = vmatpush1.msra.mxu0 0.0
    %239 = vmatprep.subr.mxu0 0.0
    %240 = vmatpush1.msra.mxu0 0.0
    %241 = vmatprep.subr.mxu0 0.0
    %242 = vmatpush1.msra.mxu0 0.0
    %243 = vmatprep.subr.mxu0 0.0
    %244 = vmatpush1.msra.mxu0 0.0
    %245 = vmatprep.subr.mxu0 0.0
    %246 = vmatpush1.msra.mxu0 0.0
    %247 = vmatprep.subr.mxu0 0.0
    %248 = vmatpush1.msra.mxu0 0.0
    %249 = vmatprep.subr.mxu0 0.0
    %250 = vmatpush1.msra.mxu0 0.0
    %251 = vmatprep.subr.mxu0 0.0
    %252 = vmatpush1.msra.mxu0 0.0
    %253 = vmatprep.subr.mxu0 0.0
    %254 = vmatpush1.msra.mxu0 0.0
    %255 = vmatprep.subr.mxu0 0.0
    %256 = vmatpush1.msra.mxu0 0.0
    %257 = vmatprep.subr.mxu0 0.0
    %258 = vmatpush1.msra.mxu0 0.0
    %259 = vmatprep.subr.mxu0 0.0
    %260 = vmatpush1.msra.mxu0 0.0
    %261 = vmatprep.subr.mxu0 0.0
    %262 = vmatpush1.msra.mxu0 0.0
    %263 = vmatprep.subr.mxu0 0.0
    %264 = vmatpush1.msra.mxu0 0.0
    %265 = vmatprep.subr.mxu0 0.0
    %266 = vmatpush1.msra.mxu0 0.0
    %267 = vmatprep.subr.mxu0 0.0
    %268 = vmatpush1.msra.mxu0 0.0
    %269 = vmatprep.subr.mxu0 0.0
    %270 = vmatpush1.msra.mxu0 0.0
    %271 = vmatprep.subr.mxu0 0.0
    %272 = vmatpush1.msra.mxu0 0.0
    %273 = vmatprep.subr.mxu0 0.0
    %274 = vmatpush1.msra.mxu0 0.0
    %275 = vmatprep.subr.mxu0 0.0
    %276 = vmatpush1.msra.mxu0 0.0
    %277 = vmatprep.subr.mxu0 0.0
    %278 = vmatpush1.msra.mxu0 0.0
    %279 = vmatprep.subr.mxu0 0.0
    %280 = vmatpush1.msra.mxu0 0.0
    %281 = vmatprep.mubr.f32.mxu0 0.0
    %282 = vmatmul.mubr.f32.gmra.mrb[0].mxu0 %v81
    %v283 = vpop.f32.mrb[0].mxu0
    %v284 = vadd.f32 0.0, %v283
    %v285 = vpop.f32.mrb[0].mxu0
    %v286 = vadd.f32 0.0, %v285
    %287 = vmatprep.mubr.f32.mxu0 0.0
    %288 = vmatmul.mubr.f32.gmra.mrb[0].mxu0 %v84
    %v289 = vpop.f32.mrb[0].mxu0
    %v290 = vadd.f32 0.0, %v289
    %v291 = vpop.f32.mrb[0].mxu0
    %v292 = vadd.f32 0.0, %v291
    %293 = vmatprep.mubr.f32.mxu0 0.0
    %294 = vmatmul.mubr.f32.gmra.mrb[0].mxu0 %v87
    %v295 = vpop.f32.mrb[0].mxu0
    %v296 = vadd.f32 0.0, %v295
    %v297 = vpop.f32.mrb[0].mxu0
    %v298 = vadd.f32 0.0, %v297
    %299 = vmatprep.mubr.f32.mxu0 0.0
    %300 = vmatmul.mubr.f32.gmra.mrb[0].mxu0 %v90
    %v301 = vpop.f32.mrb[0].mxu0
    %v302 = vadd.f32 0.0, %v301
    %v303 = vpop.f32.mrb[0].mxu0
    %v304 = vadd.f32 0.0, %v303
    %305 = vmatprep.mubr.f32.mxu0 0.0
    %306 = vmatmul.mubr.f32.gmra.mrb[0].mxu0 %v93
    %v307 = vpop.f32.mrb[0].mxu0
    %v308 = vadd.f32 0.0, %v307
    %v309 = vpop.f32.mrb[0].mxu0
    %v310 = vadd.f32 0.0, %v309
    %311 = vmatprep.mubr.f32.mxu0 0.0
    %312 = vmatmul.mubr.f32.gmra.mrb[0].mxu0 %v96
    %v313 = vpop.f32.mrb[0].mxu0
    %v314 = vadd.f32 0.0, %v313
    %v315 = vpop.f32.mrb[0].mxu0
    %v316 = vadd.f32 0.0, %v315
    %317 = vmatprep.mubr.f32.mxu0 0.0
    %318 = vmatmul.mubr.f32.gmra.mrb[0].mxu0 %v99
    %v319 = vpop.f32.mrb[0].mxu0
    %v320 = vadd.f32 0.0, %v319
    %v321 = vpop.f32.mrb[0].mxu0
    %v322 = vadd.f32 0.0, %v321
    %323 = vmatprep.mubr.f32.mxu0 0.0
    %324 = vmatmul.mubr.f32.gmra.mrb[0].mxu0 %v102
    %v325 = vpop.f32.mrb[0].mxu0
    %v326 = vadd.f32 0.0, %v325
    %v327 = vpop.f32.mrb[0].mxu0
    %v328 = vadd.f32 0.0, %v327
    %329 = vdwg.mxu0
    %330 = vst [vmem:[#allocation2] sm:$0xff] %v171
    %331 = vst [vmem:[#allocation2 + $0x8] sm:$0xff] %v173
    %332 = vst [vmem:[#allocation2 + $0x10] sm:$0xff] %v284
    %333 = vst [vmem:[#allocation2 + $0x18] sm:$0xff] %v286
    %334 = vst [vmem:[#allocation2 + $0x20] sm:$0xff] %v177
    %335 = vst [vmem:[#allocation2 + $0x28] sm:$0xff] %v179
    %336 = vst [vmem:[#allocation2 + $0x30] sm:$0xff] %v290
    %337 = vst [vmem:[#allocation2 + $0x38] sm:$0xff] %v292
    %338 = vst [vmem:[#allocation2 + $0x40] sm:$0xff] %v183
    %339 = vst [vmem:[#allocation2 + $0x48] sm:$0xff] %v185
    %340 = vst [vmem:[#allocation2 + $0x50] sm:$0xff] %v296
    %341 = vst [vmem:[#allocation2 + $0x58] sm:$0xff] %v298
    %342 = vst [vmem:[#allocation2 + $0x60] sm:$0xff] %v189
    %343 = vst [vmem:[#allocation2 + $0x68] sm:$0xff] %v191
    %344 = vst [vmem:[#allocation2 + $0x70] sm:$0xff] %v302
    %345 = vst [vmem:[#allocation2 + $0x78] sm:$0xff] %v304
    %346 = vst [vmem:[#allocation2 + $0x80] sm:$0xff] %v195
    %347 = vst [vmem:[#allocation2 + $0x88] sm:$0xff] %v197
    %348 = vst [vmem:[#allocation2 + $0x90] sm:$0xff] %v308
    %349 = vst [vmem:[#allocation2 + $0x98] sm:$0xff] %v310
    %350 = vst [vmem:[#allocation2 + $0xa0] sm:$0xff] %v201
    %351 = vst [vmem:[#allocation2 + $0xa8] sm:$0xff] %v203
    %352 = vst [vmem:[#allocation2 + $0xb0] sm:$0xff] %v314
    %353 = vst [vmem:[#allocation2 + $0xb8] sm:$0xff] %v316
    %354 = vst [vmem:[#allocation2 + $0xc0] sm:$0xff] %v207
    %355 = vst [vmem:[#allocation2 + $0xc8] sm:$0xff] %v209
    %356 = vst [vmem:[#allocation2 + $0xd0] sm:$0xff] %v320
    %357 = vst [vmem:[#allocation2 + $0xd8] sm:$0xff] %v322
    %358 = vst [vmem:[#allocation2 + $0xe0] sm:$0xff] %v213
    %359 = vst [vmem:[#allocation2 + $0xe8] sm:$0xff] %v215
    %360 = vst [vmem:[#allocation2 + $0xf0] sm:$0xff] %v326
    %361 = vst [vmem:[#allocation2 + $0xf8] sm:$0xff] %v328
    %v362 = vld [vmem:[#allocation3] sm:$0xff]
    %v363 = vld [vmem:[#allocation4] sm:$0xff]
    %v364 = vld [vmem:[#allocation2] sm:$0xff]
    %v365 = vld [vmem:[#allocation2 + $0x8] sm:$0xff]
    %v366 = vld [vmem:[#allocation2 + $0x10] sm:$0xff]
    %v367 = vld [vmem:[#allocation2 + $0x18] sm:$0xff]
    %v368 = vpack.c.bf16 %v362, %v362
    %v369 = vld [vmem:[#allocation10] sm:$0xff]
    %v370 = vld [vmem:[#allocation10 + $0x8] sm:$0xff]
    %v371 = vld [vmem:[#allocation10 + $0x10] sm:$0xff]
    %v372 = vld [vmem:[#allocation10 + $0x18] sm:$0xff]
    %v373 = vld [vmem:[#allocation10 + $0x20] sm:$0xff]
    %v374 = vld [vmem:[#allocation10 + $0x28] sm:$0xff]
    %v375 = vld [vmem:[#allocation10 + $0x30] sm:$0xff]
    %v376 = vld [vmem:[#allocation10 + $0x38] sm:$0xff]
    %v377 = vld [vmem:[#allocation10 + $0x40] sm:$0xff]
    %v378 = vld [vmem:[#allocation10 + $0x48] sm:$0xff]
    %v379 = vld [vmem:[#allocation10 + $0x50] sm:$0xff]
    %v380 = vld [vmem:[#allocation10 + $0x58] sm:$0xff]
    %v381 = vld [vmem:[#allocation10 + $0x60] sm:$0xff]
    %v382 = vld [vmem:[#allocation10 + $0x68] sm:$0xff]
    %v383 = vld [vmem:[#allocation10 + $0x70] sm:$0xff]
    %v384 = vld [vmem:[#allocation10 + $0x78] sm:$0xff]
    %v385 = vld [vmem:[#allocation10 + $0x80] sm:$0xff]
    %v386 = vld [vmem:[#allocation10 + $0x88] sm:$0xff]
    %v387 = vld [vmem:[#allocation10 + $0x90] sm:$0xff]
    %v388 = vld [vmem:[#allocation10 + $0x98] sm:$0xff]
    %v389 = vld [vmem:[#allocation10 + $0xa0] sm:$0xff]
    %v390 = vld [vmem:[#allocation10 + $0xa8] sm:$0xff]
    %v391 = vld [vmem:[#allocation10 + $0xb0] sm:$0xff]
    %v392 = vld [vmem:[#allocation10 + $0xb8] sm:$0xff]
    %v393 = vld [vmem:[#allocation10 + $0xc0] sm:$0xff]
    %v394 = vld [vmem:[#allocation10 + $0xc8] sm:$0xff]
    %v395 = vld [vmem:[#allocation10 + $0xd0] sm:$0xff]
    %v396 = vld [vmem:[#allocation10 + $0xd8] sm:$0xff]
    %v397 = vld [vmem:[#allocation10 + $0xe0] sm:$0xff]
    %v398 = vld [vmem:[#allocation10 + $0xe8] sm:$0xff]
    %v399 = vld [vmem:[#allocation10 + $0xf0] sm:$0xff]
    %v400 = vld [vmem:[#allocation10 + $0xf8] sm:$0xff]
    %v433 = vunpack.c.l.b16 %v369
    %v434 = vunpack.c.h.b16 %v369
    %v435 = vunpack.c.l.b16 %v370
    %v436 = vunpack.c.h.b16 %v370
    %v437 = vunpack.c.l.b16 %v371
    %v438 = vunpack.c.h.b16 %v371
    %v439 = vunpack.c.l.b16 %v372
    %v440 = vunpack.c.h.b16 %v372
    %v441 = vunpack.c.l.b16 %v373
    %v442 = vunpack.c.h.b16 %v373
    %v443 = vunpack.c.l.b16 %v374
    %v444 = vunpack.c.h.b16 %v374
    %v445 = vunpack.c.l.b16 %v375
    %v446 = vunpack.c.h.b16 %v375
    %v447 = vunpack.c.l.b16 %v376
    %v448 = vunpack.c.h.b16 %v376
    %v449 = vunpack.c.l.b16 %v377
    %v450 = vunpack.c.h.b16 %v377
    %v451 = vunpack.c.l.b16 %v378
    %v452 = vunpack.c.h.b16 %v378
    %v453 = vunpack.c.l.b16 %v379
    %v454 = vunpack.c.h.b16 %v379
    %v455 = vunpack.c.l.b16 %v380
    %v456 = vunpack.c.h.b16 %v380
    %v457 = vunpack.c.l.b16 %v381
    %v458 = vunpack.c.h.b16 %v381
    %v459 = vunpack.c.l.b16 %v382
    %v460 = vunpack.c.h.b16 %v382
    %v461 = vunpack.c.l.b16 %v383
    %v462 = vunpack.c.h.b16 %v383
    %v463 = vunpack.c.l.b16 %v384
    %v464 = vunpack.c.h.b16 %v384
    %v465 = vunpack.c.l.b16 %v385
    %v466 = vunpack.c.h.b16 %v385
    %v467 = vunpack.c.l.b16 %v386
    %v468 = vunpack.c.h.b16 %v386
    %v469 = vunpack.c.l.b16 %v387
    %v470 = vunpack.c.h.b16 %v387
    %v471 = vunpack.c.l.b16 %v388
    %v472 = vunpack.c.h.b16 %v388
    %v473 = vunpack.c.l.b16 %v389
    %v474 = vunpack.c.h.b16 %v389
    %v475 = vunpack.c.l.b16 %v390
    %v476 = vunpack.c.h.b16 %v390
    %v477 = vunpack.c.l.b16 %v391
    %v478 = vunpack.c.h.b16 %v391
    %v479 = vunpack.c.l.b16 %v392
    %v480 = vunpack.c.h.b16 %v392
    %v481 = vunpack.c.l.b16 %v393
    %v482 = vunpack.c.h.b16 %v393
    %v483 = vunpack.c.l.b16 %v394
    %v484 = vunpack.c.h.b16 %v394
    %v485 = vunpack.c.l.b16 %v395
    %v486 = vunpack.c.h.b16 %v395
    %v487 = vunpack.c.l.b16 %v396
    %v488 = vunpack.c.h.b16 %v396
    %v489 = vunpack.c.l.b16 %v397
    %v490 = vunpack.c.h.b16 %v397
    %v491 = vunpack.c.l.b16 %v398
    %v492 = vunpack.c.h.b16 %v398
    %v493 = vunpack.c.l.b16 %v399
    %v494 = vunpack.c.h.b16 %v399
    %v495 = vunpack.c.l.b16 %v400
    %v496 = vunpack.c.h.b16 %v400
    %v497 = vpack.c.b16 %v437, %v433
    %v498 = vpack.c.b16 %v438, %v434
    %v499 = vpack.c.b16 %v439, %v435
    %v500 = vpack.c.b16 %v440, %v436
    %v501 = vpack.c.b16 %v445, %v441
    %v502 = vpack.c.b16 %v446, %v442
    %v503 = vpack.c.b16 %v447, %v443
    %v504 = vpack.c.b16 %v448, %v444
    %v505 = vpack.c.b16 %v453, %v449
    %v506 = vpack.c.b16 %v454, %v450
    %v507 = vpack.c.b16 %v455, %v451
    %v508 = vpack.c.b16 %v456, %v452
    %v509 = vpack.c.b16 %v461, %v457
    %v510 = vpack.c.b16 %v462, %v458
    %v511 = vpack.c.b16 %v463, %v459
    %v512 = vpack.c.b16 %v464, %v460
    %v513 = vpack.c.b16 %v469, %v465
    %v514 = vpack.c.b16 %v470, %v466
    %v515 = vpack.c.b16 %v471, %v467
    %v516 = vpack.c.b16 %v472, %v468
    %v517 = vpack.c.b16 %v477, %v473
    %v518 = vpack.c.b16 %v478, %v474
    %v519 = vpack.c.b16 %v479, %v475
    %v520 = vpack.c.b16 %v480, %v476
    %v521 = vpack.c.b16 %v485, %v481
    %v522 = vpack.c.b16 %v486, %v482
    %v523 = vpack.c.b16 %v487, %v483
    %v524 = vpack.c.b16 %v488, %v484
    %v525 = vpack.c.b16 %v493, %v489
    %v526 = vpack.c.b16 %v494, %v490
    %v527 = vpack.c.b16 %v495, %v491
    %v528 = vpack.c.b16 %v496, %v492
    %561 = vmatprep.subr.bf16.mxu0 %v498
    %562 = vmatpush1.bf16.msra.mxu0 %v497
    %563 = vmatprep.subr.bf16.mxu0 %v502
    %564 = vmatpush1.bf16.msra.mxu0 %v501
    %565 = vmatprep.subr.bf16.mxu0 %v506
    %566 = vmatpush1.bf16.msra.mxu0 %v505
    %567 = vmatprep.subr.bf16.mxu0 %v510
    %568 = vmatpush1.bf16.msra.mxu0 %v509
    %569 = vmatprep.subr.bf16.mxu0 %v514
    %570 = vmatpush1.bf16.msra.mxu0 %v513
    %571 = vmatprep.subr.bf16.mxu0 %v518
    %572 = vmatpush1.bf16.msra.mxu0 %v517
    %573 = vmatprep.subr.bf16.mxu0 %v522
    %574 = vmatpush1.bf16.msra.mxu0 %v521
    %575 = vmatprep.subr.bf16.mxu0 %v526
    %576 = vmatpush1.bf16.msra.mxu0 %v525
    %577 = vmatprep.subr.bf16.mxu0 0
    %578 = vmatpush1.bf16.msra.mxu0 0
    %579 = vmatprep.subr.bf16.mxu0 0
    %580 = vmatpush1.bf16.msra.mxu0 0
    %581 = vmatprep.subr.bf16.mxu0 0
    %582 = vmatpush1.bf16.msra.mxu0 0
    %583 = vmatprep.subr.bf16.mxu0 0
    %584 = vmatpush1.bf16.msra.mxu0 0
    %585 = vmatprep.subr.bf16.mxu0 0
    %586 = vmatpush1.bf16.msra.mxu0 0
    %587 = vmatprep.subr.bf16.mxu0 0
    %588 = vmatpush1.bf16.msra.mxu0 0
    %589 = vmatprep.subr.bf16.mxu0 0
    %590 = vmatpush1.bf16.msra.mxu0 0
    %591 = vmatprep.subr.bf16.mxu0 0
    %592 = vmatpush1.bf16.msra.mxu0 0
    %593 = vmatprep.mubr.bf16.mxu0 0
    %594 = vmatmul.mubr.bf16.gmra.mrb[0].mxu0 %v368
    %v595 = vpop.f32.mrb[0].mxu0
    %v596 = vadd.f32 0.0, %v595
    %v597 = vpop.f32.mrb[0].mxu0
    %v598 = vadd.f32 0.0, %v597
    %v599 = vpop.f32.mrb[0].mxu0
    %v600 = vpop.f32.mrb[0].mxu0
    %601 = vdwg.mxu0
    %602 = vmatprep.subr.bf16.mxu0 %v500
    %603 = vmatpush1.bf16.msra.mxu0 %v499
    %604 = vmatprep.subr.bf16.mxu0 %v504
    %605 = vmatpush1.bf16.msra.mxu0 %v503
    %606 = vmatprep.subr.bf16.mxu0 %v508
    %607 = vmatpush1.bf16.msra.mxu0 %v507
    %608 = vmatprep.subr.bf16.mxu0 %v512
    %609 = vmatpush1.bf16.msra.mxu0 %v511
    %610 = vmatprep.subr.bf16.mxu0 %v516
    %611 = vmatpush1.bf16.msra.mxu0 %v515
    %612 = vmatprep.subr.bf16.mxu0 %v520
    %613 = vmatpush1.bf16.msra.mxu0 %v519
    %614 = vmatprep.subr.bf16.mxu0 %v524
    %615 = vmatpush1.bf16.msra.mxu0 %v523
    %616 = vmatprep.subr.bf16.mxu0 %v528
    %617 = vmatpush1.bf16.msra.mxu0 %v527
    %618 = vmatprep.subr.bf16.mxu0 0
    %619 = vmatpush1.bf16.msra.mxu0 0
    %620 = vmatprep.subr.bf16.mxu0 0
    %621 = vmatpush1.bf16.msra.mxu0 0
    %622 = vmatprep.subr.bf16.mxu0 0
    %623 = vmatpush1.bf16.msra.mxu0 0
    %624 = vmatprep.subr.bf16.mxu0 0
    %625 = vmatpush1.bf16.msra.mxu0 0
    %626 = vmatprep.subr.bf16.mxu0 0
    %627 = vmatpush1.bf16.msra.mxu0 0
    %628 = vmatprep.subr.bf16.mxu0 0
    %629 = vmatpush1.bf16.msra.mxu0 0
    %630 = vmatprep.subr.bf16.mxu0 0
    %631 = vmatpush1.bf16.msra.mxu0 0
    %632 = vmatprep.subr.bf16.mxu0 0
    %633 = vmatpush1.bf16.msra.mxu0 0
    %634 = vmatprep.mubr.bf16.mxu0 0
    %635 = vmatmul.mubr.bf16.gmra.mrb[0].mxu0 %v368
    %v636 = vpop.f32.mrb[0].mxu0
    %v637 = vadd.f32 0.0, %v636
    %v638 = vpop.f32.mrb[0].mxu0
    %v639 = vadd.f32 0.0, %v638
    %v640 = vpop.f32.mrb[0].mxu0
    %v641 = vpop.f32.mrb[0].mxu0
    %642 = vdwg.mxu0
    %v643 = vadd.f32 %v364, %v596
    %v644 = vadd.f32 %v365, %v598
    %v645 = vadd.f32 %v366, %v637
    %v646 = vadd.f32 %v367, %v639
    %v647 = vxor.u32 %v643, 2147483648
    %v648 = vxor.u32 %v644, 2147483648
    %v649 = vxor.u32 %v645, 2147483648
    %v650 = vxor.u32 %v646, 2147483648
    %v651 = vmul.f32 %v647, 1.442695
    %v652 = vpow.pop %v651
    %v653 = vmul.f32 %v648, 1.442695
    %v654 = vpow.pop %v653
    %v655 = vmul.f32 %v649, 1.442695
    %v656 = vpow.pop %v655
    %v657 = vmul.f32 %v650, 1.442695
    %v658 = vpow.pop %v657
    %v659 = vadd.f32 %v652, 1.0
    %v660 = vadd.f32 %v654, 1.0
    %v661 = vadd.f32 %v656, 1.0
    %v662 = vadd.f32 %v658, 1.0
    %v663 = vrcp.pop %v659
    %v664 = vmul.f32 1.0, %v663
    %v665 = vrcp.pop %v660
    %v666 = vmul.f32 1.0, %v665
    %v667 = vrcp.pop %v661
    %v668 = vmul.f32 1.0, %v667
    %v669 = vrcp.pop %v662
    %v670 = vmul.f32 1.0, %v669
    %v671 = vmul.f32 %v670, 2.0
    %v672 = vsub.f32 %v671, 1.0
    %v673 = vmul.f32 %v666, %v363
    %v674 = vmul.f32 %v664, %v672
    %v675 = vadd.f32 %v673, %v674
    %v676 = vtanh.pop %v675
    %v677 = vmul.f32 %v668, %v676
    %s678 = scalar_lea.vmem [#allocation2], 32
    %v679 = vld [vmem:[%s678] sm:$0xff]
    %v680 = vld [vmem:[%s678 + $0x8] sm:$0xff]
    %v681 = vld [vmem:[%s678 + $0x10] sm:$0xff]
    %v682 = vld [vmem:[%s678 + $0x18] sm:$0xff]
    %v683 = vpack.c.bf16 %v677, %v677
    %684 = vmatprep.subr.bf16.mxu0 %v498
    %685 = vmatpush1.bf16.msra.mxu0 %v497
    %686 = vmatprep.subr.bf16.mxu0 %v502
    %687 = vmatpush1.bf16.msra.mxu0 %v501
    %688 = vmatprep.subr.bf16.mxu0 %v506
    %689 = vmatpush1.bf16.msra.mxu0 %v505
    %690 = vmatprep.subr.bf16.mxu0 %v510
    %691 = vmatpush1.bf16.msra.mxu0 %v509
    %692 = vmatprep.subr.bf16.mxu0 %v514
    %693 = vmatpush1.bf16.msra.mxu0 %v513
    %694 = vmatprep.subr.bf16.mxu0 %v518
    %695 = vmatpush1.bf16.msra.mxu0 %v517
    %696 = vmatprep.subr.bf16.mxu0 %v522
    %697 = vmatpush1.bf16.msra.mxu0 %v521
    %698 = vmatprep.subr.bf16.mxu0 %v526
    %699 = vmatpush1.bf16.msra.mxu0 %v525
    %700 = vmatprep.subr.bf16.mxu0 0
    %701 = vmatpush1.bf16.msra.mxu0 0
    %702 = vmatprep.subr.bf16.mxu0 0
    %703 = vmatpush1.bf16.msra.mxu0 0
    %704 = vmatprep.subr.bf16.mxu0 0
    %705 = vmatpush1.bf16.msra.mxu0 0
    %706 = vmatprep.subr.bf16.mxu0 0
    %707 = vmatpush1.bf16.msra.mxu0 0
    %708 = vmatprep.subr.bf16.mxu0 0
    %709 = vmatpush1.bf16.msra.mxu0 0
    %710 = vmatprep.subr.bf16.mxu0 0
    %711 = vmatpush1.bf16.msra.mxu0 0
    %712 = vmatprep.subr.bf16.mxu0 0
    %713 = vmatpush1.bf16.msra.mxu0 0
    %714 = vmatprep.subr.bf16.mxu0 0
    %715 = vmatpush1.bf16.msra.mxu0 0
    %716 = vmatprep.mubr.bf16.mxu0 0
    %717 = vmatmul.mubr.bf16.gmra.mrb[0].mxu0 %v683
    %v718 = vpop.f32.mrb[0].mxu0
    %v719 = vadd.f32 0.0, %v718
    %v720 = vpop.f32.mrb[0].mxu0
    %v721 = vadd.f32 0.0, %v720
    %v722 = vpop.f32.mrb[0].mxu0
    %v723 = vpop.f32.mrb[0].mxu0
    %724 = vdwg.mxu0
    %725 = vmatprep.subr.bf16.mxu0 %v500
    %726 = vmatpush1.bf16.msra.mxu0 %v499
    %727 = vmatprep.subr.bf16.mxu0 %v504
    %728 = vmatpush1.bf16.msra.mxu0 %v503
    %729 = vmatprep.subr.bf16.mxu0 %v508
    %730 = vmatpush1.bf16.msra.mxu0 %v507
    %731 = vmatprep.subr.bf16.mxu0 %v512
    %732 = vmatpush1.bf16.msra.mxu0 %v511
    %733 = vmatprep.subr.bf16.mxu0 %v516
    %734 = vmatpush1.bf16.msra.mxu0 %v515
    %735 = vmatprep.subr.bf16.mxu0 %v520
    %736 = vmatpush1.bf16.msra.mxu0 %v519
    %737 = vmatprep.subr.bf16.mxu0 %v524
    %738 = vmatpush1.bf16.msra.mxu0 %v523
    %739 = vmatprep.subr.bf16.mxu0 %v528
    %740 = vmatpush1.bf16.msra.mxu0 %v527
    %741 = vmatprep.subr.bf16.mxu0 0
    %742 = vmatpush1.bf16.msra.mxu0 0
    %743 = vmatprep.subr.bf16.mxu0 0
    %744 = vmatpush1.bf16.msra.mxu0 0
    %745 = vmatprep.subr.bf16.mxu0 0
    %746 = vmatpush1.bf16.msra.mxu0 0
    %747 = vmatprep.subr.bf16.mxu0 0
    %748 = vmatpush1.bf16.msra.mxu0 0
    %749 = vmatprep.subr.bf16.mxu0 0
    %750 = vmatpush1.bf16.msra.mxu0 0
    %751 = vmatprep.subr.bf16.mxu0 0
    %752 = vmatpush1.bf16.msra.mxu0 0
    %753 = vmatprep.subr.bf16.mxu0 0
    %754 = vmatpush1.bf16.msra.mxu0 0
    %755 = vmatprep.subr.bf16.mxu0 0
    %756 = vmatpush1.bf16.msra.mxu0 0
    %757 = vmatprep.mubr.bf16.mxu0 0
    %758 = vmatmul.mubr.bf16.gmra.mrb[0].mxu0 %v683
    %v759 = vpop.f32.mrb[0].mxu0
    %v760 = vadd.f32 0.0, %v759
    %v761 = vpop.f32.mrb[0].mxu0
    %v762 = vadd.f32 0.0, %v761
    %v763 = vpop.f32.mrb[0].mxu0
    %v764 = vpop.f32.mrb[0].mxu0
    %765 = vdwg.mxu0
    %v766 = vadd.f32 %v679, %v719
    %v767 = vadd.f32 %v680, %v721
    %v768 = vadd.f32 %v681, %v760
    %v769 = vadd.f32 %v682, %v762
    %v770 = vxor.u32 %v766, 2147483648
    %v771 = vxor.u32 %v767, 2147483648
    %v772 = vxor.u32 %v768, 2147483648
    %v773 = vxor.u32 %v769, 2147483648
    %v774 = vmul.f32 %v770, 1.442695
    %v775 = vpow.pop %v774
    %v776 = vmul.f32 %v771, 1.442695
    %v777 = vpow.pop %v776
    %v778 = vmul.f32 %v772, 1.442695
    %v779 = vpow.pop %v778
    %v780 = vmul.f32 %v773, 1.442695
    %v781 = vpow.pop %v780
    %v782 = vadd.f32 %v775, 1.0
    %v783 = vadd.f32 %v777, 1.0
    %v784 = vadd.f32 %v779, 1.0
    %v785 = vadd.f32 %v781, 1.0
    %v786 = vrcp.pop %v782
    %v787 = vmul.f32 1.0, %v786
    %v788 = vrcp.pop %v783
    %v789 = vmul.f32 1.0, %v788
    %v790 = vrcp.pop %v784
    %v791 = vmul.f32 1.0, %v790
    %v792 = vrcp.pop %v785
    %v793 = vmul.f32 1.0, %v792
    %v794 = vmul.f32 %v793, 2.0
    %v795 = vsub.f32 %v794, 1.0
    %v796 = vmul.f32 %v789, %v675
    %v797 = vmul.f32 %v787, %v795
    %v798 = vadd.f32 %v796, %v797
    %v799 = vtanh.pop %v798
    %v800 = vmul.f32 %v791, %v799
    %s801 = scalar_lea.vmem [#allocation2], 64
    %v802 = vld [vmem:[%s801] sm:$0xff]
    %v803 = vld [vmem:[%s801 + $0x8] sm:$0xff]
    %v804 = vld [vmem:[%s801 + $0x10] sm:$0xff]
    %v805 = vld [vmem:[%s801 + $0x18] sm:$0xff]
    %v806 = vpack.c.bf16 %v800, %v800
    %807 = vmatprep.subr.bf16.mxu0 %v498
    %808 = vmatpush1.bf16.msra.mxu0 %v497
    %809 = vmatprep.subr.bf16.mxu0 %v502
    %810 = vmatpush1.bf16.msra.mxu0 %v501
    %811 = vmatprep.subr.bf16.mxu0 %v506
    %812 = vmatpush1.bf16.msra.mxu0 %v505
    %813 = vmatprep.subr.bf16.mxu0 %v510
    %814 = vmatpush1.bf16.msra.mxu0 %v509
    %815 = vmatprep.subr.bf16.mxu0 %v514
    %816 = vmatpush1.bf16.msra.mxu0 %v513
    %817 = vmatprep.subr.bf16.mxu0 %v518
    %818 = vmatpush1.bf16.msra.mxu0 %v517
    %819 = vmatprep.subr.bf16.mxu0 %v522
    %820 = vmatpush1.bf16.msra.mxu0 %v521
    %821 = vmatprep.subr.bf16.mxu0 %v526
    %822 = vmatpush1.bf16.msra.mxu0 %v525
    %823 = vmatprep.subr.bf16.mxu0 0
    %824 = vmatpush1.bf16.msra.mxu0 0
    %825 = vmatprep.subr.bf16.mxu0 0
    %826 = vmatpush1.bf16.msra.mxu0 0
    %827 = vmatprep.subr.bf16.mxu0 0
    %828 = vmatpush1.bf16.msra.mxu0 0
    %829 = vmatprep.subr.bf16.mxu0 0
    %830 = vmatpush1.bf16.msra.mxu0 0
    %831 = vmatprep.subr.bf16.mxu0 0
    %832 = vmatpush1.bf16.msra.mxu0 0
    %833 = vmatprep.subr.bf16.mxu0 0
    %834 = vmatpush1.bf16.msra.mxu0 0
    %835 = vmatprep.subr.bf16.mxu0 0
    %836 = vmatpush1.bf16.msra.mxu0 0
    %837 = vmatprep.subr.bf16.mxu0 0
    %838 = vmatpush1.bf16.msra.mxu0 0
    %839 = vmatprep.mubr.bf16.mxu0 0
    %840 = vmatmul.mubr.bf16.gmra.mrb[0].mxu0 %v806
    %v841 = vpop.f32.mrb[0].mxu0
    %v842 = vadd.f32 0.0, %v841
    %v843 = vpop.f32.mrb[0].mxu0
    %v844 = vadd.f32 0.0, %v843
    %v845 = vpop.f32.mrb[0].mxu0
    %v846 = vpop.f32.mrb[0].mxu0
    %847 = vdwg.mxu0
    %848 = vmatprep.subr.bf16.mxu0 %v500
    %849 = vmatpush1.bf16.msra.mxu0 %v499
    %850 = vmatprep.subr.bf16.mxu0 %v504
    %851 = vmatpush1.bf16.msra.mxu0 %v503
    %852 = vmatprep.subr.bf16.mxu0 %v508
    %853 = vmatpush1.bf16.msra.mxu0 %v507
    %854 = vmatprep.subr.bf16.mxu0 %v512
    %855 = vmatpush1.bf16.msra.mxu0 %v511
    %856 = vmatprep.subr.bf16.mxu0 %v516
    %857 = vmatpush1.bf16.msra.mxu0 %v515
    %858 = vmatprep.subr.bf16.mxu0 %v520
    %859 = vmatpush1.bf16.msra.mxu0 %v519
    %860 = vmatprep.subr.bf16.mxu0 %v524
    %861 = vmatpush1.bf16.msra.mxu0 %v523
    %862 = vmatprep.subr.bf16.mxu0 %v528
    %863 = vmatpush1.bf16.msra.mxu0 %v527
    %864 = vmatprep.subr.bf16.mxu0 0
    %865 = vmatpush1.bf16.msra.mxu0 0
    %866 = vmatprep.subr.bf16.mxu0 0
    %867 = vmatpush1.bf16.msra.mxu0 0
    %868 = vmatprep.subr.bf16.mxu0 0
    %869 = vmatpush1.bf16.msra.mxu0 0
    %870 = vmatprep.subr.bf16.mxu0 0
    %871 = vmatpush1.bf16.msra.mxu0 0
    %872 = vmatprep.subr.bf16.mxu0 0
    %873 = vmatpush1.bf16.msra.mxu0 0
    %874 = vmatprep.subr.bf16.mxu0 0
    %875 = vmatpush1.bf16.msra.mxu0 0
    %876 = vmatprep.subr.bf16.mxu0 0
    %877 = vmatpush1.bf16.msra.mxu0 0
    %878 = vmatprep.subr.bf16.mxu0 0
    %879 = vmatpush1.bf16.msra.mxu0 0
    %880 = vmatprep.mubr.bf16.mxu0 0
    %881 = vmatmul.mubr.bf16.gmra.mrb[0].mxu0 %v806
    %v882 = vpop.f32.mrb[0].mxu0
    %v883 = vadd.f32 0.0, %v882
    %v884 = vpop.f32.mrb[0].mxu0
    %v885 = vadd.f32 0.0, %v884
    %v886 = vpop.f32.mrb[0].mxu0
    %v887 = vpop.f32.mrb[0].mxu0
    %888 = vdwg.mxu0
    %v889 = vadd.f32 %v802, %v842
    %v890 = vadd.f32 %v803, %v844
    %v891 = vadd.f32 %v804, %v883
    %v892 = vadd.f32 %v805, %v885
    %v893 = vxor.u32 %v889, 2147483648
    %v894 = vxor.u32 %v890, 2147483648
    %v895 = vxor.u32 %v891, 2147483648
    %v896 = vxor.u32 %v892, 2147483648
    %v897 = vmul.f32 %v893, 1.442695
    %v898 = vpow.pop %v897
    %v899 = vmul.f32 %v894, 1.442695
    %v900 = vpow.pop %v899
    %v901 = vmul.f32 %v895, 1.442695
    %v902 = vpow.pop %v901
    %v903 = vmul.f32 %v896, 1.442695
    %v904 = vpow.pop %v903
    %v905 = vadd.f32 %v898, 1.0
    %v906 = vadd.f32 %v900, 1.0
    %v907 = vadd.f32 %v902, 1.0
    %v908 = vadd.f32 %v904, 1.0
    %v909 = vrcp.pop %v905
    %v910 = vmul.f32 1.0, %v909
    %v911 = vrcp.pop %v906
    %v912 = vmul.f32 1.0, %v911
    %v913 = vrcp.pop %v907
    %v914 = vmul.f32 1.0, %v913
    %v915 = vrcp.pop %v908
    %v916 = vmul.f32 1.0, %v915
    %v917 = vmul.f32 %v916, 2.0
    %v918 = vsub.f32 %v917, 1.0
    %v919 = vmul.f32 %v912, %v798
    %v920 = vmul.f32 %v910, %v918
    %v921 = vadd.f32 %v919, %v920
    %v922 = vtanh.pop %v921
    %v923 = vmul.f32 %v914, %v922
    %s924 = scalar_lea.vmem [#allocation2], 96
    %v925 = vld [vmem:[%s924] sm:$0xff]
    %v926 = vld [vmem:[%s924 + $0x8] sm:$0xff]
    %v927 = vld [vmem:[%s924 + $0x10] sm:$0xff]
    %v928 = vld [vmem:[%s924 + $0x18] sm:$0xff]
    %v929 = vpack.c.bf16 %v923, %v923
    %930 = vmatprep.subr.bf16.mxu0 %v498
    %931 = vmatpush1.bf16.msra.mxu0 %v497
    %932 = vmatprep.subr.bf16.mxu0 %v502
    %933 = vmatpush1.bf16.msra.mxu0 %v501
    %934 = vmatprep.subr.bf16.mxu0 %v506
    %935 = vmatpush1.bf16.msra.mxu0 %v505
    %936 = vmatprep.subr.bf16.mxu0 %v510
    %937 = vmatpush1.bf16.msra.mxu0 %v509
    %938 = vmatprep.subr.bf16.mxu0 %v514
    %939 = vmatpush1.bf16.msra.mxu0 %v513
    %940 = vmatprep.subr.bf16.mxu0 %v518
    %941 = vmatpush1.bf16.msra.mxu0 %v517
    %942 = vmatprep.subr.bf16.mxu0 %v522
    %943 = vmatpush1.bf16.msra.mxu0 %v521
    %944 = vmatprep.subr.bf16.mxu0 %v526
    %945 = vmatpush1.bf16.msra.mxu0 %v525
    %946 = vmatprep.subr.bf16.mxu0 0
    %947 = vmatpush1.bf16.msra.mxu0 0
    %948 = vmatprep.subr.bf16.mxu0 0
    %949 = vmatpush1.bf16.msra.mxu0 0
    %950 = vmatprep.subr.bf16.mxu0 0
    %951 = vmatpush1.bf16.msra.mxu0 0
    %952 = vmatprep.subr.bf16.mxu0 0
    %953 = vmatpush1.bf16.msra.mxu0 0
    %954 = vmatprep.subr.bf16.mxu0 0
    %955 = vmatpush1.bf16.msra.mxu0 0
    %956 = vmatprep.subr.bf16.mxu0 0
    %957 = vmatpush1.bf16.msra.mxu0 0
    %958 = vmatprep.subr.bf16.mxu0 0
    %959 = vmatpush1.bf16.msra.mxu0 0
    %960 = vmatprep.subr.bf16.mxu0 0
    %961 = vmatpush1.bf16.msra.mxu0 0
    %962 = vmatprep.mubr.bf16.mxu0 0
    %963 = vmatmul.mubr.bf16.gmra.mrb[0].mxu0 %v929
    %v964 = vpop.f32.mrb[0].mxu0
    %v965 = vadd.f32 0.0, %v964
    %v966 = vpop.f32.mrb[0].mxu0
    %v967 = vadd.f32 0.0, %v966
    %v968 = vpop.f32.mrb[0].mxu0
    %v969 = vpop.f32.mrb[0].mxu0
    %970 = vdwg.mxu0
    %971 = vmatprep.subr.bf16.mxu0 %v500
    %972 = vmatpush1.bf16.msra.mxu0 %v499
    %973 = vmatprep.subr.bf16.mxu0 %v504
    %974 = vmatpush1.bf16.msra.mxu0 %v503
    %975 = vmatprep.subr.bf16.mxu0 %v508
    %976 = vmatpush1.bf16.msra.mxu0 %v507
    %977 = vmatprep.subr.bf16.mxu0 %v512
    %978 = vmatpush1.bf16.msra.mxu0 %v511
    %979 = vmatprep.subr.bf16.mxu0 %v516
    %980 = vmatpush1.bf16.msra.mxu0 %v515
    %981 = vmatprep.subr.bf16.mxu0 %v520
    %982 = vmatpush1.bf16.msra.mxu0 %v519
    %983 = vmatprep.subr.bf16.mxu0 %v524
    %984 = vmatpush1.bf16.msra.mxu0 %v523
    %985 = vmatprep.subr.bf16.mxu0 %v528
    %986 = vmatpush1.bf16.msra.mxu0 %v527
    %987 = vmatprep.subr.bf16.mxu0 0
    %988 = vmatpush1.bf16.msra.mxu0 0
    %989 = vmatprep.subr.bf16.mxu0 0
    %990 = vmatpush1.bf16.msra.mxu0 0
    %991 = vmatprep.subr.bf16.mxu0 0
    %992 = vmatpush1.bf16.msra.mxu0 0
    %993 = vmatprep.subr.bf16.mxu0 0
    %994 = vmatpush1.bf16.msra.mxu0 0
    %995 = vmatprep.subr.bf16.mxu0 0
    %996 = vmatpush1.bf16.msra.mxu0 0
    %997 = vmatprep.subr.bf16.mxu0 0
    %998 = vmatpush1.bf16.msra.mxu0 0
    %999 = vmatprep.subr.bf16.mxu0 0
    %1000 = vmatpush1.bf16.msra.mxu0 0
    %1001 = vmatprep.subr.bf16.mxu0 0
    %1002 = vmatpush1.bf16.msra.mxu0 0
    %1003 = vmatprep.mubr.bf16.mxu0 0
    %1004 = vmatmul.mubr.bf16.gmra.mrb[0].mxu0 %v929
    %v1005 = vpop.f32.mrb[0].mxu0
    %v1006 = vadd.f32 0.0, %v1005
    %v1007 = vpop.f32.mrb[0].mxu0
    %v1008 = vadd.f32 0.0, %v1007
    %v1009 = vpop.f32.mrb[0].mxu0
    %v1010 = vpop.f32.mrb[0].mxu0
    %1011 = vdwg.mxu0
    %v1012 = vadd.f32 %v925, %v965
    %v1013 = vadd.f32 %v926, %v967
    %v1014 = vadd.f32 %v927, %v1006
    %v1015 = vadd.f32 %v928, %v1008
    %v1016 = vxor.u32 %v1012, 2147483648
    %v1017 = vxor.u32 %v1013, 2147483648
    %v1018 = vxor.u32 %v1014, 2147483648
    %v1019 = vxor.u32 %v1015, 2147483648
    %v1020 = vmul.f32 %v1016, 1.442695
    %v1021 = vpow.pop %v1020
    %v1022 = vmul.f32 %v1017, 1.442695
    %v1023 = vpow.pop %v1022
    %v1024 = vmul.f32 %v1018, 1.442695
    %v1025 = vpow.pop %v1024
    %v1026 = vmul.f32 %v1019, 1.442695
    %v1027 = vpow.pop %v1026
    %v1028 = vadd.f32 %v1021, 1.0
    %v1029 = vadd.f32 %v1023, 1.0
    %v1030 = vadd.f32 %v1025, 1.0
    %v1031 = vadd.f32 %v1027, 1.0
    %v1032 = vrcp.pop %v1028
    %v1033 = vmul.f32 1.0, %v1032
    %v1034 = vrcp.pop %v1029
    %v1035 = vmul.f32 1.0, %v1034
    %v1036 = vrcp.pop %v1030
    %v1037 = vmul.f32 1.0, %v1036
    %v1038 = vrcp.pop %v1031
    %v1039 = vmul.f32 1.0, %v1038
    %v1040 = vmul.f32 %v1039, 2.0
    %v1041 = vsub.f32 %v1040, 1.0
    %v1042 = vmul.f32 %v1035, %v921
    %v1043 = vmul.f32 %v1033, %v1041
    %v1044 = vadd.f32 %v1042, %v1043
    %v1045 = vtanh.pop %v1044
    %v1046 = vmul.f32 %v1037, %v1045
    %s1047 = scalar_lea.vmem [#allocation2], 128
    %v1048 = vld [vmem:[%s1047] sm:$0xff]
    %v1049 = vld [vmem:[%s1047 + $0x8] sm:$0xff]
    %v1050 = vld [vmem:[%s1047 + $0x10] sm:$0xff]
    %v1051 = vld [vmem:[%s1047 + $0x18] sm:$0xff]
    %v1052 = vpack.c.bf16 %v1046, %v1046
    %1053 = vmatprep.subr.bf16.mxu0 %v498
    %1054 = vmatpush1.bf16.msra.mxu0 %v497
    %1055 = vmatprep.subr.bf16.mxu0 %v502
    %1056 = vmatpush1.bf16.msra.mxu0 %v501
    %1057 = vmatprep.subr.bf16.mxu0 %v506
    %1058 = vmatpush1.bf16.msra.mxu0 %v505
    %1059 = vmatprep.subr.bf16.mxu0 %v510
    %1060 = vmatpush1.bf16.msra.mxu0 %v509
    %1061 = vmatprep.subr.bf16.mxu0 %v514
    %1062 = vmatpush1.bf16.msra.mxu0 %v513
    %1063 = vmatprep.subr.bf16.mxu0 %v518
    %1064 = vmatpush1.bf16.msra.mxu0 %v517
    %1065 = vmatprep.subr.bf16.mxu0 %v522
    %1066 = vmatpush1.bf16.msra.mxu0 %v521
    %1067 = vmatprep.subr.bf16.mxu0 %v526
    %1068 = vmatpush1.bf16.msra.mxu0 %v525
    %1069 = vmatprep.subr.bf16.mxu0 0
    %1070 = vmatpush1.bf16.msra.mxu0 0
    %1071 = vmatprep.subr.bf16.mxu0 0
    %1072 = vmatpush1.bf16.msra.mxu0 0
    %1073 = vmatprep.subr.bf16.mxu0 0
    %1074 = vmatpush1.bf16.msra.mxu0 0
    %1075 = vmatprep.subr.bf16.mxu0 0
    %1076 = vmatpush1.bf16.msra.mxu0 0
    %1077 = vmatprep.subr.bf16.mxu0 0
    %1078 = vmatpush1.bf16.msra.mxu0 0
    %1079 = vmatprep.subr.bf16.mxu0 0
    %1080 = vmatpush1.bf16.msra.mxu0 0
    %1081 = vmatprep.subr.bf16.mxu0 0
    %1082 = vmatpush1.bf16.msra.mxu0 0
    %1083 = vmatprep.subr.bf16.mxu0 0
    %1084 = vmatpush1.bf16.msra.mxu0 0
    %1085 = vmatprep.mubr.bf16.mxu0 0
    %1086 = vmatmul.mubr.bf16.gmra.mrb[0].mxu0 %v1052
    %v1087 = vpop.f32.mrb[0].mxu0
    %v1088 = vadd.f32 0.0, %v1087
    %v1089 = vpop.f32.mrb[0].mxu0
    %v1090 = vadd.f32 0.0, %v1089
    %v1091 = vpop.f32.mrb[0].mxu0
    %v1092 = vpop.f32.mrb[0].mxu0
    %1093 = vdwg.mxu0
    %1094 = vmatprep.subr.bf16.mxu0 %v500
    %1095 = vmatpush1.bf16.msra.mxu0 %v499
    %1096 = vmatprep.subr.bf16.mxu0 %v504
    %1097 = vmatpush1.bf16.msra.mxu0 %v503
    %1098 = vmatprep.subr.bf16.mxu0 %v508
    %1099 = vmatpush1.bf16.msra.mxu0 %v507
    %1100 = vmatprep.subr.bf16.mxu0 %v512
    %1101 = vmatpush1.bf16.msra.mxu0 %v511
    %1102 = vmatprep.subr.bf16.mxu0 %v516
    %1103 = vmatpush1.bf16.msra.mxu0 %v515
    %1104 = vmatprep.subr.bf16.mxu0 %v520
    %1105 = vmatpush1.bf16.msra.mxu0 %v519
    %1106 = vmatprep.subr.bf16.mxu0 %v524
    %1107 = vmatpush1.bf16.msra.mxu0 %v523
    %1108 = vmatprep.subr.bf16.mxu0 %v528
    %1109 = vmatpush1.bf16.msra.mxu0 %v527
    %1110 = vmatprep.subr.bf16.mxu0 0
    %1111 = vmatpush1.bf16.msra.mxu0 0
    %1112 = vmatprep.subr.bf16.mxu0 0
    %1113 = vmatpush1.bf16.msra.mxu0 0
    %1114 = vmatprep.subr.bf16.mxu0 0
    %1115 = vmatpush1.bf16.msra.mxu0 0
    %1116 = vmatprep.subr.bf16.mxu0 0
    %1117 = vmatpush1.bf16.msra.mxu0 0
    %1118 = vmatprep.subr.bf16.mxu0 0
    %1119 = vmatpush1.bf16.msra.mxu0 0
    %1120 = vmatprep.subr.bf16.mxu0 0
    %1121 = vmatpush1.bf16.msra.mxu0 0
    %1122 = vmatprep.subr.bf16.mxu0 0
    %1123 = vmatpush1.bf16.msra.mxu0 0
    %1124 = vmatprep.subr.bf16.mxu0 0
    %1125 = vmatpush1.bf16.msra.mxu0 0
    %1126 = vmatprep.mubr.bf16.mxu0 0
    %1127 = vmatmul.mubr.bf16.gmra.mrb[0].mxu0 %v1052
    %v1128 = vpop.f32.mrb[0].mxu0
    %v1129 = vadd.f32 0.0, %v1128
    %v1130 = vpop.f32.mrb[0].mxu0
    %v1131 = vadd.f32 0.0, %v1130
    %v1132 = vpop.f32.mrb[0].mxu0
    %v1133 = vpop.f32.mrb[0].mxu0
    %1134 = vdwg.mxu0
    %v1135 = vadd.f32 %v1048, %v1088
    %v1136 = vadd.f32 %v1049, %v1090
    %v1137 = vadd.f32 %v1050, %v1129
    %v1138 = vadd.f32 %v1051, %v1131
    %v1139 = vxor.u32 %v1135, 2147483648
    %v1140 = vxor.u32 %v1136, 2147483648
    %v1141 = vxor.u32 %v1137, 2147483648
    %v1142 = vxor.u32 %v1138, 2147483648
    %v1143 = vmul.f32 %v1139, 1.442695
    %v1144 = vpow.pop %v1143
    %v1145 = vmul.f32 %v1140, 1.442695
    %v1146 = vpow.pop %v1145
    %v1147 = vmul.f32 %v1141, 1.442695
    %v1148 = vpow.pop %v1147
    %v1149 = vmul.f32 %v1142, 1.442695
    %v1150 = vpow.pop %v1149
    %v1151 = vadd.f32 %v1144, 1.0
    %v1152 = vadd.f32 %v1146, 1.0
    %v1153 = vadd.f32 %v1148, 1.0
    %v1154 = vadd.f32 %v1150, 1.0
    %v1155 = vrcp.pop %v1151
    %v1156 = vmul.f32 1.0, %v1155
    %v1157 = vrcp.pop %v1152
    %v1158 = vmul.f32 1.0, %v1157
    %v1159 = vrcp.pop %v1153
    %v1160 = vmul.f32 1.0, %v1159
    %v1161 = vrcp.pop %v1154
    %v1162 = vmul.f32 1.0, %v1161
    %v1163 = vmul.f32 %v1162, 2.0
    %v1164 = vsub.f32 %v1163, 1.0
    %v1165 = vmul.f32 %v1158, %v1044
    %v1166 = vmul.f32 %v1156, %v1164
    %v1167 = vadd.f32 %v1165, %v1166
    %v1168 = vtanh.pop %v1167
    %v1169 = vmul.f32 %v1160, %v1168
    %s1170 = scalar_lea.vmem [#allocation2], 160
    %v1171 = vld [vmem:[%s1170] sm:$0xff]
    %v1172 = vld [vmem:[%s1170 + $0x8] sm:$0xff]
    %v1173 = vld [vmem:[%s1170 + $0x10] sm:$0xff]
    %v1174 = vld [vmem:[%s1170 + $0x18] sm:$0xff]
    %v1175 = vpack.c.bf16 %v1169, %v1169
    %1176 = vmatprep.subr.bf16.mxu0 %v498
    %1177 = vmatpush1.bf16.msra.mxu0 %v497
    %1178 = vmatprep.subr.bf16.mxu0 %v502
    %1179 = vmatpush1.bf16.msra.mxu0 %v501
    %1180 = vmatprep.subr.bf16.mxu0 %v506
    %1181 = vmatpush1.bf16.msra.mxu0 %v505
    %1182 = vmatprep.subr.bf16.mxu0 %v510
    %1183 = vmatpush1.bf16.msra.mxu0 %v509
    %1184 = vmatprep.subr.bf16.mxu0 %v514
    %1185 = vmatpush1.bf16.msra.mxu0 %v513
    %1186 = vmatprep.subr.bf16.mxu0 %v518
    %1187 = vmatpush1.bf16.msra.mxu0 %v517
    %1188 = vmatprep.subr.bf16.mxu0 %v522
    %1189 = vmatpush1.bf16.msra.mxu0 %v521
    %1190 = vmatprep.subr.bf16.mxu0 %v526
    %1191 = vmatpush1.bf16.msra.mxu0 %v525
    %1192 = vmatprep.subr.bf16.mxu0 0
    %1193 = vmatpush1.bf16.msra.mxu0 0
    %1194 = vmatprep.subr.bf16.mxu0 0
    %1195 = vmatpush1.bf16.msra.mxu0 0
    %1196 = vmatprep.subr.bf16.mxu0 0
    %1197 = vmatpush1.bf16.msra.mxu0 0
    %1198 = vmatprep.subr.bf16.mxu0 0
    %1199 = vmatpush1.bf16.msra.mxu0 0
    %1200 = vmatprep.subr.bf16.mxu0 0
    %1201 = vmatpush1.bf16.msra.mxu0 0
    %1202 = vmatprep.subr.bf16.mxu0 0
    %1203 = vmatpush1.bf16.msra.mxu0 0
    %1204 = vmatprep.subr.bf16.mxu0 0
    %1205 = vmatpush1.bf16.msra.mxu0 0
    %1206 = vmatprep.subr.bf16.mxu0 0
    %1207 = vmatpush1.bf16.msra.mxu0 0
    %1208 = vmatprep.mubr.bf16.mxu0 0
    %1209 = vmatmul.mubr.bf16.gmra.mrb[0].mxu0 %v1175
    %v1210 = vpop.f32.mrb[0].mxu0
    %v1211 = vadd.f32 0.0, %v1210
    %v1212 = vpop.f32.mrb[0].mxu0
    %v1213 = vadd.f32 0.0, %v1212
    %v1214 = vpop.f32.mrb[0].mxu0
    %v1215 = vpop.f32.mrb[0].mxu0
    %1216 = vdwg.mxu0
    %1217 = vmatprep.subr.bf16.mxu0 %v500
    %1218 = vmatpush1.bf16.msra.mxu0 %v499
    %1219 = vmatprep.subr.bf16.mxu0 %v504
    %1220 = vmatpush1.bf16.msra.mxu0 %v503
    %1221 = vmatprep.subr.bf16.mxu0 %v508
    %1222 = vmatpush1.bf16.msra.mxu0 %v507
    %1223 = vmatprep.subr.bf16.mxu0 %v512
    %1224 = vmatpush1.bf16.msra.mxu0 %v511
    %1225 = vmatprep.subr.bf16.mxu0 %v516
    %1226 = vmatpush1.bf16.msra.mxu0 %v515
    %1227 = vmatprep.subr.bf16.mxu0 %v520
    %1228 = vmatpush1.bf16.msra.mxu0 %v519
    %1229 = vmatprep.subr.bf16.mxu0 %v524
    %1230 = vmatpush1.bf16.msra.mxu0 %v523
    %1231 = vmatprep.subr.bf16.mxu0 %v528
    %1232 = vmatpush1.bf16.msra.mxu0 %v527
    %1233 = vmatprep.subr.bf16.mxu0 0
    %1234 = vmatpush1.bf16.msra.mxu0 0
    %1235 = vmatprep.subr.bf16.mxu0 0
    %1236 = vmatpush1.bf16.msra.mxu0 0
    %1237 = vmatprep.subr.bf16.mxu0 0
    %1238 = vmatpush1.bf16.msra.mxu0 0
    %1239 = vmatprep.subr.bf16.mxu0 0
    %1240 = vmatpush1.bf16.msra.mxu0 0
    %1241 = vmatprep.subr.bf16.mxu0 0
    %1242 = vmatpush1.bf16.msra.mxu0 0
    %1243 = vmatprep.subr.bf16.mxu0 0
    %1244 = vmatpush1.bf16.msra.mxu0 0
    %1245 = vmatprep.subr.bf16.mxu0 0
    %1246 = vmatpush1.bf16.msra.mxu0 0
    %1247 = vmatprep.subr.bf16.mxu0 0
    %1248 = vmatpush1.bf16.msra.mxu0 0
    %1249 = vmatprep.mubr.bf16.mxu0 0
    %1250 = vmatmul.mubr.bf16.gmra.mrb[0].mxu0 %v1175
    %v1251 = vpop.f32.mrb[0].mxu0
    %v1252 = vadd.f32 0.0, %v1251
    %v1253 = vpop.f32.mrb[0].mxu0
    %v1254 = vadd.f32 0.0, %v1253
    %v1255 = vpop.f32.mrb[0].mxu0
    %v1256 = vpop.f32.mrb[0].mxu0
    %1257 = vdwg.mxu0
    %v1258 = vadd.f32 %v1171, %v1211
    %v1259 = vadd.f32 %v1172, %v1213
    %v1260 = vadd.f32 %v1173, %v1252
    %v1261 = vadd.f32 %v1174, %v1254
    %v1262 = vxor.u32 %v1258, 2147483648
    %v1263 = vxor.u32 %v1259, 2147483648
    %v1264 = vxor.u32 %v1260, 2147483648
    %v1265 = vxor.u32 %v1261, 2147483648
    %v1266 = vmul.f32 %v1262, 1.442695
    %v1267 = vpow.pop %v1266
    %v1268 = vmul.f32 %v1263, 1.442695
    %v1269 = vpow.pop %v1268
    %v1270 = vmul.f32 %v1264, 1.442695
    %v1271 = vpow.pop %v1270
    %v1272 = vmul.f32 %v1265, 1.442695
    %v1273 = vpow.pop %v1272
    %v1274 = vadd.f32 %v1267, 1.0
    %v1275 = vadd.f32 %v1269, 1.0
    %v1276 = vadd.f32 %v1271, 1.0
    %v1277 = vadd.f32 %v1273, 1.0
    %v1278 = vrcp.pop %v1274
    %v1279 = vmul.f32 1.0, %v1278
    %v1280 = vrcp.pop %v1275
    %v1281 = vmul.f32 1.0, %v1280
    %v1282 = vrcp.pop %v1276
    %v1283 = vmul.f32 1.0, %v1282
    %v1284 = vrcp.pop %v1277
    %v1285 = vmul.f32 1.0, %v1284
    %v1286 = vmul.f32 %v1285, 2.0
    %v1287 = vsub.f32 %v1286, 1.0
    %v1288 = vmul.f32 %v1281, %v1167
    %v1289 = vmul.f32 %v1279, %v1287
    %v1290 = vadd.f32 %v1288, %v1289
    %v1291 = vtanh.pop %v1290
    %v1292 = vmul.f32 %v1283, %v1291
    %s1293 = scalar_lea.vmem [#allocation2], 192
    %v1294 = vld [vmem:[%s1293] sm:$0xff]
    %v1295 = vld [vmem:[%s1293 + $0x8] sm:$0xff]
    %v1296 = vld [vmem:[%s1293 + $0x10] sm:$0xff]
    %v1297 = vld [vmem:[%s1293 + $0x18] sm:$0xff]
    %v1298 = vpack.c.bf16 %v1292, %v1292
    %1299 = vmatprep.subr.bf16.mxu0 %v498
    %1300 = vmatpush1.bf16.msra.mxu0 %v497
    %1301 = vmatprep.subr.bf16.mxu0 %v502
    %1302 = vmatpush1.bf16.msra.mxu0 %v501
    %1303 = vmatprep.subr.bf16.mxu0 %v506
    %1304 = vmatpush1.bf16.msra.mxu0 %v505
    %1305 = vmatprep.subr.bf16.mxu0 %v510
    %1306 = vmatpush1.bf16.msra.mxu0 %v509
    %1307 = vmatprep.subr.bf16.mxu0 %v514
    %1308 = vmatpush1.bf16.msra.mxu0 %v513
    %1309 = vmatprep.subr.bf16.mxu0 %v518
    %1310 = vmatpush1.bf16.msra.mxu0 %v517
    %1311 = vmatprep.subr.bf16.mxu0 %v522
    %1312 = vmatpush1.bf16.msra.mxu0 %v521
    %1313 = vmatprep.subr.bf16.mxu0 %v526
    %1314 = vmatpush1.bf16.msra.mxu0 %v525
    %1315 = vmatprep.subr.bf16.mxu0 0
    %1316 = vmatpush1.bf16.msra.mxu0 0
    %1317 = vmatprep.subr.bf16.mxu0 0
    %1318 = vmatpush1.bf16.msra.mxu0 0
    %1319 = vmatprep.subr.bf16.mxu0 0
    %1320 = vmatpush1.bf16.msra.mxu0 0
    %1321 = vmatprep.subr.bf16.mxu0 0
    %1322 = vmatpush1.bf16.msra.mxu0 0
    %1323 = vmatprep.subr.bf16.mxu0 0
    %1324 = vmatpush1.bf16.msra.mxu0 0
    %1325 = vmatprep.subr.bf16.mxu0 0
    %1326 = vmatpush1.bf16.msra.mxu0 0
    %1327 = vmatprep.subr.bf16.mxu0 0
    %1328 = vmatpush1.bf16.msra.mxu0 0
    %1329 = vmatprep.subr.bf16.mxu0 0
    %1330 = vmatpush1.bf16.msra.mxu0 0
    %1331 = vmatprep.mubr.bf16.mxu0 0
    %1332 = vmatmul.mubr.bf16.gmra.mrb[0].mxu0 %v1298
    %v1333 = vpop.f32.mrb[0].mxu0
    %v1334 = vadd.f32 0.0, %v1333
    %v1335 = vpop.f32.mrb[0].mxu0
    %v1336 = vadd.f32 0.0, %v1335
    %v1337 = vpop.f32.mrb[0].mxu0
    %v1338 = vpop.f32.mrb[0].mxu0
    %1339 = vdwg.mxu0
    %1340 = vmatprep.subr.bf16.mxu0 %v500
    %1341 = vmatpush1.bf16.msra.mxu0 %v499
    %1342 = vmatprep.subr.bf16.mxu0 %v504
    %1343 = vmatpush1.bf16.msra.mxu0 %v503
    %1344 = vmatprep.subr.bf16.mxu0 %v508
    %1345 = vmatpush1.bf16.msra.mxu0 %v507
    %1346 = vmatprep.subr.bf16.mxu0 %v512
    %1347 = vmatpush1.bf16.msra.mxu0 %v511
    %1348 = vmatprep.subr.bf16.mxu0 %v516
    %1349 = vmatpush1.bf16.msra.mxu0 %v515
    %1350 = vmatprep.subr.bf16.mxu0 %v520
    %1351 = vmatpush1.bf16.msra.mxu0 %v519
    %1352 = vmatprep.subr.bf16.mxu0 %v524
    %1353 = vmatpush1.bf16.msra.mxu0 %v523
    %1354 = vmatprep.subr.bf16.mxu0 %v528
    %1355 = vmatpush1.bf16.msra.mxu0 %v527
    %1356 = vmatprep.subr.bf16.mxu0 0
    %1357 = vmatpush1.bf16.msra.mxu0 0
    %1358 = vmatprep.subr.bf16.mxu0 0
    %1359 = vmatpush1.bf16.msra.mxu0 0
    %1360 = vmatprep.subr.bf16.mxu0 0
    %1361 = vmatpush1.bf16.msra.mxu0 0
    %1362 = vmatprep.subr.bf16.mxu0 0
    %1363 = vmatpush1.bf16.msra.mxu0 0
    %1364 = vmatprep.subr.bf16.mxu0 0
    %1365 = vmatpush1.bf16.msra.mxu0 0
    %1366 = vmatprep.subr.bf16.mxu0 0
    %1367 = vmatpush1.bf16.msra.mxu0 0
    %1368 = vmatprep.subr.bf16.mxu0 0
    %1369 = vmatpush1.bf16.msra.mxu0 0
    %1370 = vmatprep.subr.bf16.mxu0 0
    %1371 = vmatpush1.bf16.msra.mxu0 0
    %1372 = vmatprep.mubr.bf16.mxu0 0
    %1373 = vmatmul.mubr.bf16.gmra.mrb[0].mxu0 %v1298
    %v1374 = vpop.f32.mrb[0].mxu0
    %v1375 = vadd.f32 0.0, %v1374
    %v1376 = vpop.f32.mrb[0].mxu0
    %v1377 = vadd.f32 0.0, %v1376
    %v1378 = vpop.f32.mrb[0].mxu0
    %v1379 = vpop.f32.mrb[0].mxu0
    %1380 = vdwg.mxu0
    %v1381 = vadd.f32 %v1294, %v1334
    %v1382 = vadd.f32 %v1295, %v1336
    %v1383 = vadd.f32 %v1296, %v1375
    %v1384 = vadd.f32 %v1297, %v1377
    %v1385 = vxor.u32 %v1381, 2147483648
    %v1386 = vxor.u32 %v1382, 2147483648
    %v1387 = vxor.u32 %v1383, 2147483648
    %v1388 = vxor.u32 %v1384, 2147483648
    %v1389 = vmul.f32 %v1385, 1.442695
    %v1390 = vpow.pop %v1389
    %v1391 = vmul.f32 %v1386, 1.442695
    %v1392 = vpow.pop %v1391
    %v1393 = vmul.f32 %v1387, 1.442695
    %v1394 = vpow.pop %v1393
    %v1395 = vmul.f32 %v1388, 1.442695
    %v1396 = vpow.pop %v1395
    %v1397 = vadd.f32 %v1390, 1.0
    %v1398 = vadd.f32 %v1392, 1.0
    %v1399 = vadd.f32 %v1394, 1.0
    %v1400 = vadd.f32 %v1396, 1.0
    %v1401 = vrcp.pop %v1397
    %v1402 = vmul.f32 1.0, %v1401
    %v1403 = vrcp.pop %v1398
    %v1404 = vmul.f32 1.0, %v1403
    %v1405 = vrcp.pop %v1399
    %v1406 = vmul.f32 1.0, %v1405
    %v1407 = vrcp.pop %v1400
    %v1408 = vmul.f32 1.0, %v1407
    %v1409 = vmul.f32 %v1408, 2.0
    %v1410 = vsub.f32 %v1409, 1.0
    %v1411 = vmul.f32 %v1404, %v1290
    %v1412 = vmul.f32 %v1402, %v1410
    %v1413 = vadd.f32 %v1411, %v1412
    %v1414 = vtanh.pop %v1413
    %v1415 = vmul.f32 %v1406, %v1414
    %s1416 = scalar_lea.vmem [#allocation2], 224
    %v1417 = vld [vmem:[%s1416] sm:$0xff]
    %v1418 = vld [vmem:[%s1416 + $0x8] sm:$0xff]
    %v1419 = vld [vmem:[%s1416 + $0x10] sm:$0xff]
    %v1420 = vld [vmem:[%s1416 + $0x18] sm:$0xff]
    %v1421 = vpack.c.bf16 %v1415, %v1415
    %1422 = vmatprep.subr.bf16.mxu0 %v498
    %1423 = vmatpush1.bf16.msra.mxu0 %v497
    %1424 = vmatprep.subr.bf16.mxu0 %v502
    %1425 = vmatpush1.bf16.msra.mxu0 %v501
    %1426 = vmatprep.subr.bf16.mxu0 %v506
    %1427 = vmatpush1.bf16.msra.mxu0 %v505
    %1428 = vmatprep.subr.bf16.mxu0 %v510
    %1429 = vmatpush1.bf16.msra.mxu0 %v509
    %1430 = vmatprep.subr.bf16.mxu0 %v514
    %1431 = vmatpush1.bf16.msra.mxu0 %v513
    %1432 = vmatprep.subr.bf16.mxu0 %v518
    %1433 = vmatpush1.bf16.msra.mxu0 %v517
    %1434 = vmatprep.subr.bf16.mxu0 %v522
    %1435 = vmatpush1.bf16.msra.mxu0 %v521
    %1436 = vmatprep.subr.bf16.mxu0 %v526
    %1437 = vmatpush1.bf16.msra.mxu0 %v525
    %1438 = vmatprep.subr.bf16.mxu0 0
    %1439 = vmatpush1.bf16.msra.mxu0 0
    %1440 = vmatprep.subr.bf16.mxu0 0
    %1441 = vmatpush1.bf16.msra.mxu0 0
    %1442 = vmatprep.subr.bf16.mxu0 0
    %1443 = vmatpush1.bf16.msra.mxu0 0
    %1444 = vmatprep.subr.bf16.mxu0 0
    %1445 = vmatpush1.bf16.msra.mxu0 0
    %1446 = vmatprep.subr.bf16.mxu0 0
    %1447 = vmatpush1.bf16.msra.mxu0 0
    %1448 = vmatprep.subr.bf16.mxu0 0
    %1449 = vmatpush1.bf16.msra.mxu0 0
    %1450 = vmatprep.subr.bf16.mxu0 0
    %1451 = vmatpush1.bf16.msra.mxu0 0
    %1452 = vmatprep.subr.bf16.mxu0 0
    %1453 = vmatpush1.bf16.msra.mxu0 0
    %1454 = vmatprep.mubr.bf16.mxu0 0
    %1455 = vmatmul.mubr.bf16.gmra.mrb[0].mxu0 %v1421
    %v1456 = vpop.f32.mrb[0].mxu0
    %v1457 = vadd.f32 0.0, %v1456
    %v1458 = vpop.f32.mrb[0].mxu0
    %v1459 = vadd.f32 0.0, %v1458
    %v1460 = vpop.f32.mrb[0].mxu0
    %v1461 = vpop.f32.mrb[0].mxu0
    %1462 = vdwg.mxu0
    %1463 = vmatprep.subr.bf16.mxu0 %v500
    %1464 = vmatpush1.bf16.msra.mxu0 %v499
    %1465 = vmatprep.subr.bf16.mxu0 %v504
    %1466 = vmatpush1.bf16.msra.mxu0 %v503
    %1467 = vmatprep.subr.bf16.mxu0 %v508
    %1468 = vmatpush1.bf16.msra.mxu0 %v507
    %1469 = vmatprep.subr.bf16.mxu0 %v512
    %1470 = vmatpush1.bf16.msra.mxu0 %v511
    %1471 = vmatprep.subr.bf16.mxu0 %v516
    %1472 = vmatpush1.bf16.msra.mxu0 %v515
    %1473 = vmatprep.subr.bf16.mxu0 %v520
    %1474 = vmatpush1.bf16.msra.mxu0 %v519
    %1475 = vmatprep.subr.bf16.mxu0 %v524
    %1476 = vmatpush1.bf16.msra.mxu0 %v523
    %1477 = vmatprep.subr.bf16.mxu0 %v528
    %1478 = vmatpush1.bf16.msra.mxu0 %v527
    %1479 = vmatprep.subr.bf16.mxu0 0
    %1480 = vmatpush1.bf16.msra.mxu0 0
    %1481 = vmatprep.subr.bf16.mxu0 0
    %1482 = vmatpush1.bf16.msra.mxu0 0
    %1483 = vmatprep.subr.bf16.mxu0 0
    %1484 = vmatpush1.bf16.msra.mxu0 0
    %1485 = vmatprep.subr.bf16.mxu0 0
    %1486 = vmatpush1.bf16.msra.mxu0 0
    %1487 = vmatprep.subr.bf16.mxu0 0
    %1488 = vmatpush1.bf16.msra.mxu0 0
    %1489 = vmatprep.subr.bf16.mxu0 0
    %1490 = vmatpush1.bf16.msra.mxu0 0
    %1491 = vmatprep.subr.bf16.mxu0 0
    %1492 = vmatpush1.bf16.msra.mxu0 0
    %1493 = vmatprep.subr.bf16.mxu0 0
    %1494 = vmatpush1.bf16.msra.mxu0 0
    %1495 = vmatprep.mubr.bf16.mxu0 0
    %1496 = vmatmul.mubr.bf16.gmra.mrb[0].mxu0 %v1421
    %v1497 = vpop.f32.mrb[0].mxu0
    %v1498 = vadd.f32 0.0, %v1497
    %v1499 = vpop.f32.mrb[0].mxu0
    %v1500 = vadd.f32 0.0, %v1499
    %v1501 = vpop.f32.mrb[0].mxu0
    %v1502 = vpop.f32.mrb[0].mxu0
    %1503 = vdwg.mxu0
    %v1504 = vadd.f32 %v1417, %v1457
    %v1505 = vadd.f32 %v1418, %v1459
    %v1506 = vadd.f32 %v1419, %v1498
    %v1507 = vadd.f32 %v1420, %v1500
    %v1508 = vxor.u32 %v1504, 2147483648
    %v1509 = vxor.u32 %v1505, 2147483648
    %v1510 = vxor.u32 %v1506, 2147483648
    %v1511 = vxor.u32 %v1507, 2147483648
    %v1512 = vmul.f32 %v1508, 1.442695
    %v1513 = vpow.pop %v1512
    %v1514 = vmul.f32 %v1509, 1.442695
    %v1515 = vpow.pop %v1514
    %v1516 = vmul.f32 %v1510, 1.442695
    %v1517 = vpow.pop %v1516
    %v1518 = vmul.f32 %v1511, 1.442695
    %v1519 = vpow.pop %v1518
    %v1520 = vadd.f32 %v1513, 1.0
    %v1521 = vadd.f32 %v1515, 1.0
    %v1522 = vadd.f32 %v1517, 1.0
    %v1523 = vadd.f32 %v1519, 1.0
    %v1524 = vrcp.pop %v1520
    %v1525 = vmul.f32 1.0, %v1524
    %v1526 = vrcp.pop %v1521
    %v1527 = vmul.f32 1.0, %v1526
    %v1528 = vrcp.pop %v1522
    %v1529 = vmul.f32 1.0, %v1528
    %v1530 = vrcp.pop %v1523
    %v1531 = vmul.f32 1.0, %v1530
    %v1532 = vmul.f32 %v1531, 2.0
    %v1533 = vsub.f32 %v1532, 1.0
    %v1534 = vmul.f32 %v1527, %v1413
    %v1535 = vmul.f32 %v1525, %v1533
    %v1536 = vadd.f32 %v1534, %v1535
    %v1537 = vtanh.pop %v1536
    %v1538 = vmul.f32 %v1529, %v1537
    %1539 = vst [vmem:[#allocation3] sm:$0xff] %v1538
    %1540 = vst [vmem:[#allocation4] sm:$0xff] %v1536
    // Predicated region
    $region38: #{tpu_custom_call.1} parent=1 // pred_check
      %p1541 = pneg %p61
    $region39: #{tpu_custom_call.1} parent=1 // pred_check_branch
      %1543 = sbr.rel (%p1541) target = $region41
    $region40: #{tpu_custom_call.1} parent=1 // pred_region
      %v1544 = vld [vmem:[#allocation3] sm:$0xff]
      %v1545 = vlaneseq
      %v1546 = vshrl.u32 %v1545, 7
      %vm1547 = vcmp.lt.s32.totalorder %v1546, 4
      %v1548 = vsel %vm1547, 1, 0
      %v1549 = vcvt.s32.f32 %v1548
      %v1550 = vmul.f32 %v1544, %v1549
      %v1551 = vrot.slane %v1550, 4
      %v1552 = vadd.f32 %v1550, %v1551
      %v1553 = vrot.slane %v1552, 2
      %v1554 = vadd.f32 %v1552, %v1553
      %v1555 = vrot.slane %v1554, 1
      %v1556 = vadd.f32 %v1554, %v1555
      %v1557 = vmul.f32 %v1556, 0.25
      %v1558 = vsub.f32 %v1544, %v1557
      %v1559 = vmul.f32 %v1558, %v1549
      %v1560 = vmul.f32 %v1559, %v1559
      %v1561 = vrot.slane %v1560, 4
      %v1562 = vadd.f32 %v1560, %v1561
      %v1563 = vrot.slane %v1562, 2
      %v1564 = vadd.f32 %v1562, %v1563
      %v1565 = vrot.slane %v1564, 1
      %v1566 = vadd.f32 %v1564, %v1565
      %v1567 = vmul.f32 %v1566, 0.25
      %v1568 = vadd.f32 %v1567, 1e-05
      %v1569 = vrsqrt.pop %v1568
      %v1570 = vmul.f32 %v1558, %v1569
      %vm1571 = vcmp.ge.f32.partialorder %v1570, 0.0
      %v1572 = vmul.f32 %v1570, 0.01
      %v1573 = vsel %vm1571, %v1570, %v1572
      %v1574 = vld [vmem:[%s3] sm:$0x1]
      %v1576 = vlaneseq
      %v1577 = vshrl.u32 %v1576, 7
      %v1578 = vsub.s32 0, %v1577
      %v1579 = vrot.slane %v1574, %v1578
      %v1581 = vmul.f32 %v1573, %v1579
      %1582 = vadd.xlane.f32.xlu0 %v1581
      %v1583 = vpop.xlane.xlu0 %1582
      %s1584 = sld [smem:[#allocation5]]
      %v1585 = vstv %s1584
      %v1586 = vadd.f32 %v1583, %v1585
      %v1587 = vxor.u32 %v1586, 2147483648
      %v1588 = vmul.f32 %v1587, 1.442695
      %v1589 = vpow.pop %v1588
      %v1590 = vadd.f32 %v1589, 1.0
      %v1591 = vrcp.pop %v1590
      %v1592 = vmul.f32 1.0, %v1591
      %vm1593 = vcmask 7168
      %1594 = vst.msk [vmem:[%s5] sm:$0xff] %vm1593, %v1592
    $region41: #{tpu_custom_call.1} parent=1 // pred_fallthru
      _
    // Predicated region
    $region42: #{tpu_custom_call.1} parent=1 // pred_check
      _
    $region43: #{tpu_custom_call.1} parent=1 // pred_check_branch
      %1596 = sbr.rel (0) target = $region45
    $region44: #{tpu_custom_call.1} parent=1 // pred_region
      _
    $region45: #{tpu_custom_call.1} parent=1 // pred_fallthru
      _
    // Predicated region
    $region46: #{tpu_custom_call.1} parent=1 // pred_check
      _
    $region47: #{tpu_custom_call.1} parent=1 // pred_check_branch
      %1598 = sbr.rel (0) target = $region49
    $region48: #{tpu_custom_call.1} parent=1 // pred_region
      _
    $region49: #{tpu_custom_call.1} parent=1 // pred_fallthru
      _
    %1599 = vsyncpa [#allocation7], 1
    %1600 = vsyncpa [#allocation9], 1

</llo_original>
